<compile_context>
chip_gen: v6e
topology: v6e:2x2x1
jax: 0.10.0
libtpu: 0.0.40
codegen_flags: <defaults>
</compile_context>

<pallas_src>
import functools
import math

import jax
import jax.numpy as jnp
from jax import lax
from jax.experimental import pallas as pl
from jax.experimental.pallas import tpu as pltpu


def _flash_attn_kernel(q_ref, k_ref, v_ref, wo_ref, bo_ref, o_ref,
                       m_sc, l_sc, acc_sc,
                       *, n_valid, tk, masked, approx_recip):
    # q_ref : (1, H, tq, dh)   query tile (pre-scaled by dim_head**-0.5)
    # k_ref : (1, H, tk, dh)   KV tile for this grid step
    # v_ref : (1, H, tk, dh)
    # wo_ref: (inner, D);  bo_ref: (1, D)
    # o_ref : (1, tq, D)
    # m_sc/l_sc: (H, tq, 1) f32   online-softmax running max / denom
    # acc_sc  : (H, tq, dh) f32   running numerator
    ki = pl.program_id(2)

    @pl.when(ki == 0)
    def _init():
        m_sc[...] = jnp.full(m_sc.shape, -jnp.inf, dtype=m_sc.dtype)
        l_sc[...] = jnp.zeros(l_sc.shape, dtype=l_sc.dtype)
        acc_sc[...] = jnp.zeros(acc_sc.shape, dtype=acc_sc.dtype)

    q = q_ref[0]                                   # (H, tq, dh)
    k = k_ref[0]                                   # (H, tk, dh)
    v = v_ref[0]                                   # (H, tk, dh)

    # Head-batched scores on the MXU, f32 accumulation: (H, tq, tk).
    s = jnp.einsum('hnd,hmd->hnm', q, k, preferred_element_type=jnp.float32)

    if masked:
        # Mask padded KV columns (only present when N was padded up to a tile
        # multiple).  exp(-1e30 - m) underflows to 0, so they never contribute.
        col = ki * tk + lax.broadcasted_iota(jnp.int32, (1, 1, tk), 2)
        s = jnp.where(col < n_valid, s, jnp.float32(-1e30))

    # Online (flash-style) softmax update.
    m_prev = m_sc[...]
    m_new = jnp.maximum(m_prev, jnp.max(s, axis=-1, keepdims=True))
    alpha = jnp.exp(m_prev - m_new)
    p = jnp.exp(s - m_new)
    l_sc[...] = alpha * l_sc[...] + jnp.sum(p, axis=-1, keepdims=True)
    acc_sc[...] = alpha * acc_sc[...] + jnp.einsum(
        'hnm,hmd->hnd', p.astype(v.dtype), v,
        preferred_element_type=jnp.float32)
    m_sc[...] = m_new

    @pl.when(ki == pl.num_programs(2) - 1)
    def _finalize():
        # Normalize (EUP reciprocal), merge heads, project out, add bias.
        out = acc_sc[...] * pl.reciprocal(l_sc[...], approx=approx_recip)
        heads, tq, dh = out.shape
        out = out.transpose(1, 0, 2).reshape(tq, heads * dh)   # (tq, inner)
        out = out.astype(wo_ref.dtype)
        y = jnp.dot(out, wo_ref[...], preferred_element_type=jnp.float32)
        y = y + bo_ref[...].astype(jnp.float32)                # (tq, D)
        # TODO(synk): training-mode dropout (p > 0) is not implemented
        # (module default p = 0.0 is the identity).
        o_ref[0] = y.astype(o_ref.dtype)


def _round_up(a, b):
    return (a + b - 1) // b * b


def self_attention(x, w_qkv, w_out, b_out=None, *, heads, dim_head,
                   q_tile=256, kv_tile=256, approx_reciprocal=True):
    """ViT SelfAttention forward.

    x     : (B, N, D)
    w_qkv : (D, 3*heads*dim_head)   == to_qkv.weight.T (bias-free)
    w_out : (heads*dim_head, D)     == to_out[0].weight.T
    b_out : (D,) or None            == to_out[0].bias
    Compute runs in x.dtype on the MXU (pass bf16 x for best TPU throughput,
    especially on v5e); accumulation is always f32.
    """
    B, N, D = x.shape
    inner = heads * dim_head
    assert w_qkv.shape == (D, 3 * inner)
    assert w_out.shape == (inner, D)
    scale = dim_head ** (-0.5)
    cdt = x.dtype

    w_qkv = w_qkv.astype(cdt)
    w_out = w_out.astype(cdt)
    if b_out is None:
        b_out = jnp.zeros((D,), dtype=cdt)
    b_out2 = b_out.reshape(1, D).astype(cdt)

    # ---- Tiling & padding (handles N like ViT's 197) -----------------------
    n8 = _round_up(N, 8)
    tq = _round_up(min(q_tile, n8), 8)
    tk = _round_up(min(kv_tile, n8), 8)
    n_pad = _round_up(N, math.lcm(tq, tk))
    nq = n_pad // tq
    num_kv = n_pad // tk
    masked = (n_pad != N)

    if masked:
        x = jnp.pad(x, ((0, 0), (0, n_pad - N), (0, 0)))

    # ---- QKV projection ONCE in the wrapper (plain XLA matmul) -------------
    qkv = x @ w_qkv                                        # (B, n_pad, 3*inner)
    q, k, v = jnp.split(qkv, 3, axis=-1)
    q = q * scale                                          # fold softmax scale

    def to_heads(t):  # b n (h d) -> b h n d
        return t.reshape(B, n_pad, heads, dim_head).transpose(0, 2, 1, 3)

    q, k, v = map(to_heads, (q, k, v))                     # (B, H, n_pad, dh)

    kernel = functools.partial(_flash_attn_kernel, n_valid=N, tk=tk,
                               masked=masked, approx_recip=approx_reciprocal)

    out = pl.pallas_call(
        kernel,
        out_shape=jax.ShapeDtypeStruct((B, n_pad, D), cdt),
        grid_spec=pltpu.PrefetchScalarGridSpec(
            num_scalar_prefetch=0,
            grid=(B, nq, num_kv),                          # KV (reduction) axis last
            in_specs=[
                pl.BlockSpec((1, heads, tq, dim_head),
                             lambda b, qi, ki: (b, 0, qi, 0)),   # q tile
                pl.BlockSpec((1, heads, tk, dim_head),
                             lambda b, qi, ki: (b, 0, ki, 0)),   # k tile
                pl.BlockSpec((1, heads, tk, dim_head),
                             lambda b, qi, ki: (b, 0, ki, 0)),   # v tile
                pl.BlockSpec((inner, D), lambda b, qi, ki: (0, 0)),  # w_out
                pl.BlockSpec((1, D), lambda b, qi, ki: (0, 0)),      # b_out
            ],
            out_specs=pl.BlockSpec((1, tq, D), lambda b, qi, ki: (b, qi, 0)),
            scratch_shapes=[
                pltpu.VMEM((heads, tq, 1), jnp.float32),         # m
                pltpu.VMEM((heads, tq, 1), jnp.float32),         # l
                pltpu.VMEM((heads, tq, dim_head), jnp.float32),  # acc
            ],
        ),
        # VMEM footprint is now N-independent (a few MiB for ViT-sized dims),
        # comfortably inside the 32 MiB scoped default on v5e/v6e/v7x.
        compiler_params=pltpu.CompilerParams(
            dimension_semantics=("parallel", "parallel", "arbitrary")),
    )(q, k, v, w_out, b_out2)

    return out[:, :N, :]


def reference_self_attention(x, w_qkv, w_out, b_out, *, heads, dim_head):
    """Plain-JAX reference mirroring the PyTorch forward (incl. to_out bias)."""
    B, N, D = x.shape
    inner = heads * dim_head
    scale = dim_head ** (-0.5)
    qkv = x @ w_qkv
    q, k, v = jnp.split(qkv, 3, axis=-1)

    def to_heads(t):  # b n (h d) -> b h n d
        return t.reshape(B, N, heads, dim_head).transpose(0, 2, 1, 3)

    q, k, v = map(to_heads, (q, k, v))
    dots = jnp.einsum('bhid,bhjd->bhij', q, k) * scale
    attn = jax.nn.softmax(dots, axis=-1)
    out = jnp.einsum('bhij,bhjd->bhid', attn, v)
    out = out.transpose(0, 2, 1, 3).reshape(B, N, inner)
    return out @ w_out + b_out


if __name__ == "__main__":
    # Small shapes consistent with the module: dim=32, heads=4, dim_head=16.
    B, N, D = 2, 8, 32
    heads, dim_head = 4, 16
    inner = heads * dim_head

    key = jax.random.PRNGKey(0)
    kx, kq, ko, kb = jax.random.split(key, 4)

    x = jax.random.normal(kx, (B, N, D), dtype=jnp.float32)
    w_qkv = jax.random.uniform(kq, (D, 3 * inner), dtype=jnp.float32,
                               minval=-1.0, maxval=1.0) * (D ** -0.5)
    w_out = jax.random.uniform(ko, (inner, D), dtype=jnp.float32,
                               minval=-1.0, maxval=1.0) * (inner ** -0.5)
    b_out = jax.random.uniform(kb, (D,), dtype=jnp.float32,
                               minval=-1.0, maxval=1.0) * (inner ** -0.5)

    ref = reference_self_attention(x, w_qkv, w_out, b_out,
                                   heads=heads, dim_head=dim_head)

    # f32-operand path (matches the PyTorch module's dtype).
    out_f32 = self_attention(x, w_qkv, w_out, b_out,
                             heads=heads, dim_head=dim_head)
    out_f32 = jax.block_until_ready(out_f32)
    assert out_f32.shape == (B, N, D)
    assert jnp.allclose(out_f32, ref, atol=1e-2, rtol=1e-2), \
        "f32 mismatch vs reference"

    # bf16-operand path (recommended on TPU: native MXU dtype, f32 accumulate).
    out_bf16 = self_attention(x.astype(jnp.bfloat16), w_qkv, w_out, b_out,
                              heads=heads, dim_head=dim_head)
    out_bf16 = jax.block_until_ready(out_bf16)
    assert jnp.allclose(out_bf16.astype(jnp.float32), ref,
                        atol=5e-2, rtol=5e-2), "bf16 mismatch vs reference"

    # Ragged-N path: forces padding + KV masking + multi-tile flash
    # accumulation over the grid's KV axis (grid = (2, 2, 2)).
    N2 = 12
    x2 = jax.random.normal(jax.random.PRNGKey(1), (B, N2, D), dtype=jnp.float32)
    ref2 = reference_self_attention(x2, w_qkv, w_out, b_out,
                                    heads=heads, dim_head=dim_head)
    out2 = self_attention(x2, w_qkv, w_out, b_out, heads=heads,
                          dim_head=dim_head, q_tile=8, kv_tile=8)
    out2 = jax.block_until_ready(out2)
    assert out2.shape == (B, N2, D)
    assert jnp.allclose(out2, ref2, atol=1e-2, rtol=1e-2), \
        "padded/masked multi-tile mismatch vs reference"

    print("KERNEL_OK")
</pallas_src>

<mosaic_0001>
module attributes {stable_mosaic.version = 11 : i64} {
  func.func @_flash_attn_kernel(%arg0: i32, %arg1: i32, %arg2: i32, %arg3: memref<1x4x8x16xf32, #tpu.memory_space<vmem>>, %arg4: memref<1x4x8x16xf32, #tpu.memory_space<vmem>>, %arg5: memref<1x4x8x16xf32, #tpu.memory_space<vmem>>, %arg6: memref<64x32xf32, #tpu.memory_space<vmem>>, %arg7: memref<1x32xf32, #tpu.memory_space<vmem>>, %arg8: memref<1x8x32xf32, #tpu.memory_space<vmem>>, %arg9: memref<4x8x1xf32, #tpu.memory_space<vmem>>, %arg10: memref<4x8x1xf32, #tpu.memory_space<vmem>>, %arg11: memref<4x8x16xf32, #tpu.memory_space<vmem>>) attributes {dimension_semantics = [#tpu.dimension_semantics<parallel>, #tpu.dimension_semantics<parallel>, #tpu.dimension_semantics<arbitrary>], iteration_bounds = array<i64: 2, 1, 1>, scalar_prefetch = 0 : i64, scratch_operands = 3 : i64, tpu.core_type = #tpu.core_type<tc>, window_params = [{transform_indices = @transform_0, window_bounds = array<i64: 1, 4, 8, 16>}, {transform_indices = @transform_1, window_bounds = array<i64: 1, 4, 8, 16>}, {transform_indices = @transform_2, window_bounds = array<i64: 1, 4, 8, 16>}, {pipeline_mode = #tpu.pipeline_mode<synchronous>, transform_indices = @transform_3, window_bounds = array<i64: 64, 32>}, {pipeline_mode = #tpu.pipeline_mode<synchronous>, transform_indices = @transform_4, window_bounds = array<i64: 1, 32>}, {transform_indices = @transform_5, window_bounds = array<i64: 1, 8, 32>}]} {
    %c0_i32 = arith.constant 0 : i32
    %0 = arith.cmpi eq, %arg2, %c0_i32 : i32
    %1 = arith.extui %0 : i1 to i32
    %c0_i32_0 = arith.constant 0 : i32
    %2 = arith.cmpi ne, %1, %c0_i32_0 : i32
    scf.if %2 {
      %cst_35 = arith.constant 0xFF800000 : f32
      %35 = vector.broadcast %cst_35 : f32 to vector<4x8x1xf32>
      %c0_36 = arith.constant 0 : index
      %c0_37 = arith.constant 0 : index
      %c0_38 = arith.constant 0 : index
      %36 = vector.load %arg9[%c0_36, %c0_37, %c0_38] : memref<4x8x1xf32, #tpu.memory_space<vmem>>, vector<4x8x1xf32>
      tpu.vector_store %arg9[%c0_36, %c0_37, %c0_38], %35 {strides = array<i32>} : memref<4x8x1xf32, #tpu.memory_space<vmem>>, vector<4x8x1xf32>,
      %cst_39 = arith.constant 0.000000e+00 : f32
      %37 = vector.broadcast %cst_39 : f32 to vector<4x8x1xf32>
      %c0_40 = arith.constant 0 : index
      %c0_41 = arith.constant 0 : index
      %c0_42 = arith.constant 0 : index
      %38 = vector.load %arg10[%c0_40, %c0_41, %c0_42] : memref<4x8x1xf32, #tpu.memory_space<vmem>>, vector<4x8x1xf32>
      tpu.vector_store %arg10[%c0_40, %c0_41, %c0_42], %37 {strides = array<i32>} : memref<4x8x1xf32, #tpu.memory_space<vmem>>, vector<4x8x1xf32>,
      %cst_43 = arith.constant 0.000000e+00 : f32
      %39 = vector.broadcast %cst_43 : f32 to vector<4x8x16xf32>
      %c0_44 = arith.constant 0 : index
      %c0_45 = arith.constant 0 : index
      %c0_46 = arith.constant 0 : index
      %40 = vector.load %arg11[%c0_44, %c0_45, %c0_46] : memref<4x8x16xf32, #tpu.memory_space<vmem>>, vector<4x8x16xf32>
      tpu.vector_store %arg11[%c0_44, %c0_45, %c0_46], %39 {strides = array<i32>} : memref<4x8x16xf32, #tpu.memory_space<vmem>>, vector<4x8x16xf32>,
    } else {
    }
    %c0 = arith.constant 0 : index
    %c0_1 = arith.constant 0 : index
    %c0_2 = arith.constant 0 : index
    %c0_3 = arith.constant 0 : index
    %3 = vector.load %arg3[%c0, %c0_1, %c0_2, %c0_3] : memref<1x4x8x16xf32, #tpu.memory_space<vmem>>, vector<1x4x8x16xf32>
    %4 = vector.shape_cast %3 : vector<1x4x8x16xf32> to vector<4x8x16xf32>
    %c0_4 = arith.constant 0 : index
    %c0_5 = arith.constant 0 : index
    %c0_6 = arith.constant 0 : index
    %c0_7 = arith.constant 0 : index
    %5 = vector.load %arg4[%c0_4, %c0_5, %c0_6, %c0_7] : memref<1x4x8x16xf32, #tpu.memory_space<vmem>>, vector<1x4x8x16xf32>
    %6 = vector.shape_cast %5 : vector<1x4x8x16xf32> to vector<4x8x16xf32>
    %c0_8 = arith.constant 0 : index
    %c0_9 = arith.constant 0 : index
    %c0_10 = arith.constant 0 : index
    %c0_11 = arith.constant 0 : index
    %7 = vector.load %arg5[%c0_8, %c0_9, %c0_10, %c0_11] : memref<1x4x8x16xf32, #tpu.memory_space<vmem>>, vector<1x4x8x16xf32>
    %8 = vector.shape_cast %7 : vector<1x4x8x16xf32> to vector<4x8x16xf32>
    "tpu.trace_start"() <{level = 10 : i32, message = "hnd,hmd->hnm"}> : () -> ()
    %cst = arith.constant dense<0.000000e+00> : vector<4x8x8xf32>
    %9 = tpu.matmul %4, %6, %cst {dimension_numbers = #tpu.dot_dimension_numbers<[2], [2], [1], [1], [0, 0, 0, 1, 1, 1], [0], [0]>} : vector<4x8x16xf32>, vector<4x8x16xf32>, vector<4x8x8xf32> -> vector<4x8x8xf32>
    "tpu.trace_stop"() : () -> ()
    %c0_12 = arith.constant 0 : index
    %c0_13 = arith.constant 0 : index
    %c0_14 = arith.constant 0 : index
    %10 = vector.load %arg9[%c0_12, %c0_13, %c0_14] : memref<4x8x1xf32, #tpu.memory_space<vmem>>, vector<4x8x1xf32>
    %cst_15 = arith.constant dense<0xFF800000> : vector<4x8xf32>
    %11 = vector.multi_reduction <maximumf>, %9, %cst_15 [2] : vector<4x8x8xf32> to vector<4x8xf32>
    %12 = vector.shape_cast %11 : vector<4x8xf32> to vector<4x8x1xf32>
    %13 = arith.maximumf %10, %12 : vector<4x8x1xf32>
    %14 = arith.subf %10, %13 : vector<4x8x1xf32>
    %15 = math.exp %14 : vector<4x8x1xf32>
    %16 = vector.broadcast %13 : vector<4x8x1xf32> to vector<4x8x8xf32>
    %17 = arith.subf %9, %16 : vector<4x8x8xf32>
    %18 = math.exp %17 : vector<4x8x8xf32>
    %c0_16 = arith.constant 0 : index
    %c0_17 = arith.constant 0 : index
    %c0_18 = arith.constant 0 : index
    %19 = vector.load %arg10[%c0_16, %c0_17, %c0_18] : memref<4x8x1xf32, #tpu.memory_space<vmem>>, vector<4x8x1xf32>
    %20 = arith.mulf %15, %19 : vector<4x8x1xf32>
    %cst_19 = arith.constant dense<0.000000e+00> : vector<4x8xf32>
    %21 = vector.multi_reduction <add>, %18, %cst_19 [2] : vector<4x8x8xf32> to vector<4x8xf32>
    %22 = vector.shape_cast %21 : vector<4x8xf32> to vector<4x8x1xf32>
    %23 = arith.addf %20, %22 : vector<4x8x1xf32>
    %c0_20 = arith.constant 0 : index
    %c0_21 = arith.constant 0 : index
    %c0_22 = arith.constant 0 : index
    %24 = vector.load %arg10[%c0_20, %c0_21, %c0_22] : memref<4x8x1xf32, #tpu.memory_space<vmem>>, vector<4x8x1xf32>
    tpu.vector_store %arg10[%c0_20, %c0_21, %c0_22], %23 {strides = array<i32>} : memref<4x8x1xf32, #tpu.memory_space<vmem>>, vector<4x8x1xf32>,
    %c0_23 = arith.constant 0 : index
    %c0_24 = arith.constant 0 : index
    %c0_25 = arith.constant 0 : index
    %25 = vector.load %arg11[%c0_23, %c0_24, %c0_25] : memref<4x8x16xf32, #tpu.memory_space<vmem>>, vector<4x8x16xf32>
    %26 = vector.broadcast %15 : vector<4x8x1xf32> to vector<4x8x16xf32>
    %27 = arith.mulf %26, %25 : vector<4x8x16xf32>
    "tpu.trace_start"() <{level = 10 : i32, message = "hnm,hmd->hnd"}> : () -> ()
    %cst_26 = arith.constant dense<0.000000e+00> : vector<4x8x16xf32>
    %28 = tpu.matmul %18, %8, %cst_26 {dimension_numbers = #tpu.dot_dimension_numbers<[2], [1], [1], [2], [0, 0, 0, 1, 1, 2], [0], [0]>} : vector<4x8x8xf32>, vector<4x8x16xf32>, vector<4x8x16xf32> -> vector<4x8x16xf32>
    "tpu.trace_stop"() : () -> ()
    %29 = arith.addf %27, %28 : vector<4x8x16xf32>
    %c0_27 = arith.constant 0 : index
    %c0_28 = arith.constant 0 : index
    %c0_29 = arith.constant 0 : index
    %30 = vector.load %arg11[%c0_27, %c0_28, %c0_29] : memref<4x8x16xf32, #tpu.memory_space<vmem>>, vector<4x8x16xf32>
    tpu.vector_store %arg11[%c0_27, %c0_28, %c0_29], %29 {strides = array<i32>} : memref<4x8x16xf32, #tpu.memory_space<vmem>>, vector<4x8x16xf32>,
    %c0_30 = arith.constant 0 : index
    %c0_31 = arith.constant 0 : index
    %c0_32 = arith.constant 0 : index
    %31 = vector.load %arg9[%c0_30, %c0_31, %c0_32] : memref<4x8x1xf32, #tpu.memory_space<vmem>>, vector<4x8x1xf32>
    tpu.vector_store %arg9[%c0_30, %c0_31, %c0_32], %13 {strides = array<i32>} : memref<4x8x1xf32, #tpu.memory_space<vmem>>, vector<4x8x1xf32>,
    %c0_i32_33 = arith.constant 0 : i32
    %32 = arith.cmpi eq, %arg2, %c0_i32_33 : i32
    %33 = arith.extui %32 : i1 to i32
    %c0_i32_34 = arith.constant 0 : i32
    %34 = arith.cmpi ne, %33, %c0_i32_34 : i32
    scf.if %34 {
      %c0_35 = arith.constant 0 : index
      %c0_36 = arith.constant 0 : index
      %c0_37 = arith.constant 0 : index
      %35 = vector.load %arg11[%c0_35, %c0_36, %c0_37] : memref<4x8x16xf32, #tpu.memory_space<vmem>>, vector<4x8x16xf32>
      %c0_38 = arith.constant 0 : index
      %c0_39 = arith.constant 0 : index
      %c0_40 = arith.constant 0 : index
      %36 = vector.load %arg10[%c0_38, %c0_39, %c0_40] : memref<4x8x1xf32, #tpu.memory_space<vmem>>, vector<4x8x1xf32>
      %37 = tpu.reciprocal %36 {approx = true} : vector<4x8x1xf32> -> vector<4x8x1xf32>
      %38 = vector.broadcast %37 : vector<4x8x1xf32> to vector<4x8x16xf32>
      %39 = arith.mulf %35, %38 : vector<4x8x16xf32>
      %40 = tpu.transpose %39, [1, 0, 2] : vector<4x8x16xf32> -> vector<8x4x16xf32>
      %41 = vector.shape_cast %40 : vector<8x4x16xf32> to vector<8x64xf32>
      %c0_41 = arith.constant 0 : index
      %c0_42 = arith.constant 0 : index
      %42 = vector.load %arg6[%c0_41, %c0_42] : memref<64x32xf32, #tpu.memory_space<vmem>>, vector<64x32xf32>
      %cst_43 = arith.constant dense<0.000000e+00> : vector<8x32xf32>
      %43 = tpu.matmul %41, %42, %cst_43 {dimension_numbers = #tpu.dot_dimension_numbers<[1], [0], [0], [1], [0, 0, 1, 1], [], []>} : vector<8x64xf32>, vector<64x32xf32>, vector<8x32xf32> -> vector<8x32xf32>
      %c0_44 = arith.constant 0 : index
      %c0_45 = arith.constant 0 : index
      %44 = vector.load %arg7[%c0_44, %c0_45] : memref<1x32xf32, #tpu.memory_space<vmem>>, vector<1x32xf32>
      %45 = vector.broadcast %44 : vector<1x32xf32> to vector<8x32xf32>
      %46 = arith.addf %43, %45 : vector<8x32xf32>
      %c0_46 = arith.constant 0 : index
      %c0_47 = arith.constant 0 : index
      %c0_48 = arith.constant 0 : index
      %47 = vector.load %arg8[%c0_46, %c0_47, %c0_48] : memref<1x8x32xf32, #tpu.memory_space<vmem>>, vector<1x8x32xf32>
      %48 = vector.shape_cast %47 : vector<1x8x32xf32> to vector<8x32xf32>
      %49 = vector.shape_cast %46 : vector<8x32xf32> to vector<1x8x32xf32>
      tpu.vector_store %arg8[%c0_46, %c0_47, %c0_48], %49 {strides = array<i32>} : memref<1x8x32xf32, #tpu.memory_space<vmem>>, vector<1x8x32xf32>,
    } else {
    }
    return
  }
  func.func @transform_0(%arg0: i32, %arg1: i32, %arg2: i32) -> (i32, i32, i32, i32) {
    %c0_i32 = arith.constant 0 : i32
    %c0_i32_0 = arith.constant 0 : i32
    %c0_i32_1 = arith.constant 0 : i32
    return %arg0, %c0_i32, %arg1, %c0_i32_0 : i32, i32, i32, i32
  }
  func.func @transform_1(%arg0: i32, %arg1: i32, %arg2: i32) -> (i32, i32, i32, i32) {
    %c0_i32 = arith.constant 0 : i32
    %c0_i32_0 = arith.constant 0 : i32
    %c0_i32_1 = arith.constant 0 : i32
    return %arg0, %c0_i32, %arg2, %c0_i32_0 : i32, i32, i32, i32
  }
  func.func @transform_2(%arg0: i32, %arg1: i32, %arg2: i32) -> (i32, i32, i32, i32) {
    %c0_i32 = arith.constant 0 : i32
    %c0_i32_0 = arith.constant 0 : i32
    %c0_i32_1 = arith.constant 0 : i32
    return %arg0, %c0_i32, %arg2, %c0_i32_0 : i32, i32, i32, i32
  }
  func.func @transform_3(%arg0: i32, %arg1: i32, %arg2: i32) -> (i32, i32) {
    %c0_i32 = arith.constant 0 : i32
    %c0_i32_0 = arith.constant 0 : i32
    %c0_i32_1 = arith.constant 0 : i32
    return %c0_i32, %c0_i32_0 : i32, i32
  }
  func.func @transform_4(%arg0: i32, %arg1: i32, %arg2: i32) -> (i32, i32) {
    %c0_i32 = arith.constant 0 : i32
    %c0_i32_0 = arith.constant 0 : i32
    %c0_i32_1 = arith.constant 0 : i32
    return %c0_i32, %c0_i32_0 : i32, i32
  }
  func.func @transform_5(%arg0: i32, %arg1: i32, %arg2: i32) -> (i32, i32, i32) {
    %c0_i32 = arith.constant 0 : i32
    %c0_i32_0 = arith.constant 0 : i32
    return %arg0, %arg1, %c0_i32 : i32, i32, i32
  }
}

</mosaic_0001>

<llo_original>
// kernel: tpu_custom_call.1
$region0: #{tpu_custom_call.1}
  #allocation0 [shape = 'u32[]', space=smem, size = 0x4, offset = 0x4, fixed_abs, tag = 'smem constant byte address 0x4 - core index']
  #allocation1 [shape = 'u32[144,128]{1,0:T(1,128)}', space=vmem, size = 0x12000, scoped, tag = 'internal scratch']
  #allocation2 [shape = 'f32[4,8,1]{2,1,0:T(8,128)}', space=vmem, size = 0x4000, scoped, tag = 'scratch operand']
  #allocation3 [shape = 'f32[4,8,1]{2,1,0:T(8,128)}', space=vmem, size = 0x4000, scoped, tag = 'scratch operand']
  #allocation4 [shape = 'f32[4,8,16]{2,1,0:T(8,128)}', space=vmem, size = 0x4000, scoped, tag = 'scratch operand']
  %s0 = inlined_call_operand.vmem [shape: f32[2,4,8,16], index: 0, kind: input, shape index: {}]
  %s1 = inlined_call_operand.hbm [shape: f32[2,4,8,16], index: 1, kind: input, shape index: {}]
  %s2 = inlined_call_operand.hbm [shape: f32[2,4,8,16], index: 2, kind: input, shape index: {}]
  %s3 = inlined_call_operand.vmem [shape: f32[64,32], index: 3, kind: input, shape index: {}]
  %s4 = inlined_call_operand.vmem [shape: f32[1,32], index: 4, kind: input, shape index: {}]
  %s5 = inlined_call_operand.hbm [shape: f32[2,8,32], index: 5, kind: output, shape index: {}]
  %s6 = sld [smem:[#allocation0]]
  $region69: #{tpu_custom_call.1} parent=0
    _
  %s8 = ssub.s32 1, %s6
  %s9 = scalar_select 0, %s8, %s6
  $region1: #{tpu_custom_call.1} parent=0
    #allocation5 [shape = 'u8[32768]{0}', space=vmem, size = 0x8000, scoped, tag = 'input window, operand 1']
    #allocation6 [shape = 's32[2]{0}', space=sflag, size = 0x8, scoped, tag = 'scoped memory for tpu_custom_call.1']
    #allocation7 [shape = 's32[2]{0}', space=sflag, size = 0x8, scoped, tag = 'scoped memory for tpu_custom_call.1']
    #allocation8 [shape = 'u8[32768]{0}', space=vmem, size = 0x8000, scoped, tag = 'input window, operand 2']
    #allocation9 [shape = 's32[2]{0}', space=sflag, size = 0x8, scoped, tag = 'scoped memory for tpu_custom_call.1']
    #allocation10 [shape = 'u8[8192]{0}', space=vmem, size = 0x2000, scoped, tag = 'output window, operand 0']
    %10 = vsyncpa [#allocation6], 0
    %s11 = scalar_lea.sflag [#allocation6], 1
    %12 = vsyncpa %s11, 0
    %13 = vsyncpa [#allocation9], 0
    %s14 = scalar_lea.sflag [#allocation9], 1
    %15 = vsyncpa %s14, 0
    %16 = vsyncpa [#allocation7], 0
    %s17 = scalar_lea.sflag [#allocation7], 1
    %18 = vsyncpa %s17, 0
    loop: start=0, step=1, limit=4
    $region2: #{tpu_custom_call.1} parent=1 // loop_pre_header
      _
    $region3: #{tpu_custom_call.1} parent=1 // loop_header
      %s20 = sphi 0, %s24
      %p21 = scmp.ge.s32.totalorder %s20, 4
      %s27 = sphi 0, %s46
      %s28 = sphi 0, %s42
      %s29 = sphi 0, %s38
      %s30 = sphi 0, %s27
      %s31 = sphi 0, %s28
      %s32 = sphi 0, %s29
      %s33 = sphi 0, %s30
      %s34 = sphi 0, %s31
      %s35 = sphi 0, %s32
      %s51 = sphi 0, %s53
      %s54 = sphi 0, %s51
      %s55 = sphi 0, %s54
      %s71 = sphi 0, %s55
      %s79 = sphi 0, %s81
      %s82 = sphi 0, %s79
      %s83 = sphi 0, %s82
      %s99 = sphi 0, %s83
      %s107 = sphi 0, %s109
      %s110 = sphi 0, %s107
      %s111 = sphi 0, %s110
      %s127 = sphi 0, %s111
      %s131 = sphi 0, %s131
      %s133 = sphi 0, %s131
      %s134 = sphi 0, %s133
      %s148 = sphi 0, %s134
      %s152 = sphi 0, %s152
      %s154 = sphi 0, %s152
      %s155 = sphi 0, %s154
      %s169 = sphi 0, %s155
      %s177 = sphi 0, %s179
      %s180 = sphi 0, %s177
      %s181 = sphi 0, %s180
      %s197 = sphi 0, %s181
    $region4: #{tpu_custom_call.1} parent=1 // loop_header_branch
      %23 = sbr.rel (%p21) target = $region8
    $region5: #{tpu_custom_call.1} parent=1 // loop_body
      %s25 = ssub.s32 %s20, 1
      %s26 = ssub.s32 %s20, 2
      %s36 = sadd.s32 1, %s29
      %p37 = scmp.ge.s32.totalorder %s36, 1
      %s38 = scalar_select %p37, 0, %s36
      %s39 = sadd.s32 1, %s28
      %s40 = scalar_select %p37, %s39, %s28
      %p41 = scmp.ge.s32.totalorder %s40, 1
      %s42 = scalar_select %p41, 0, %s40
      %s43 = sadd.s32 1, %s27
      %s44 = scalar_select %p41, %s43, %s27
      %p45 = scmp.ge.s32.totalorder %s44, 2
      %s46 = scalar_select %p45, 0, %s44
      %s47 = ssub.s32 %s27, %s46
      %s48 = ssub.s32 %s28, %s42
      %s49 = sor.u32 %s47, %s48
      %p50 = scmp.eq.s32.totalorder %s49, 0
      %s52 = sadd.s32 %s51, 1
      %s53 = scalar_select %p50, %s51, %s52
      %p56 = pneg %p50
      %p57 = scmp.eq.s32.totalorder %s20, 1
      %p58 = por %p56, %p57
      %p59 = scmp.ne.s32.totalorder %s51, %s54
      %p60 = scmp.eq.s32.totalorder %s20, 0
      %p61 = por %p59, %p60
      %p62 = scmp.ne.s32.totalorder %s51, %s54
      %p63 = scmp.eq.s32.totalorder %s25, 1
      %p64 = por %p62, %p63
      %p65 = scmp.ne.s32.totalorder %s54, %s55
      %p66 = scmp.eq.s32.totalorder %s25, 0
      %p67 = por %p65, %p66
      %p68 = scmp.ne.s32.totalorder %s54, %s55
      %p69 = scmp.eq.s32.totalorder %s26, 1
      %p70 = por %p68, %p69
      %p72 = scmp.ne.s32.totalorder %s55, %s71
      %p73 = scmp.eq.s32.totalorder %s26, 0
      %p74 = por %p72, %p73
      %s75 = ssub.s32 %s27, %s46
      %s76 = ssub.s32 %s29, %s38
      %s77 = sor.u32 %s75, %s76
      %p78 = scmp.eq.s32.totalorder %s77, 0
      %s80 = sadd.s32 %s79, 1
      %s81 = scalar_select %p78, %s79, %s80
      %p84 = pneg %p78
      %p85 = scmp.eq.s32.totalorder %s20, 1
      %p86 = por %p84, %p85
      %p87 = scmp.ne.s32.totalorder %s79, %s82
      %p88 = scmp.eq.s32.totalorder %s20, 0
      %p89 = por %p87, %p88
      %p90 = scmp.ne.s32.totalorder %s79, %s82
      %p91 = scmp.eq.s32.totalorder %s25, 1
      %p92 = por %p90, %p91
      %p93 = scmp.ne.s32.totalorder %s82, %s83
      %p94 = scmp.eq.s32.totalorder %s25, 0
      %p95 = por %p93, %p94
      %p96 = scmp.ne.s32.totalorder %s82, %s83
      %p97 = scmp.eq.s32.totalorder %s26, 1
      %p98 = por %p96, %p97
      %p100 = scmp.ne.s32.totalorder %s83, %s99
      %p101 = scmp.eq.s32.totalorder %s26, 0
      %p102 = por %p100, %p101
      %s103 = ssub.s32 %s27, %s46
      %s104 = ssub.s32 %s29, %s38
      %s105 = sor.u32 %s103, %s104
      %p106 = scmp.eq.s32.totalorder %s105, 0
      %s108 = sadd.s32 %s107, 1
      %s109 = scalar_select %p106, %s107, %s108
      %p112 = pneg %p106
      %p113 = scmp.eq.s32.totalorder %s20, 1
      %p114 = por %p112, %p113
      %p115 = scmp.ne.s32.totalorder %s107, %s110
      %p116 = scmp.eq.s32.totalorder %s20, 0
      %p117 = por %p115, %p116
      %p118 = scmp.ne.s32.totalorder %s107, %s110
      %p119 = scmp.eq.s32.totalorder %s25, 1
      %p120 = por %p118, %p119
      %p121 = scmp.ne.s32.totalorder %s110, %s111
      %p122 = scmp.eq.s32.totalorder %s25, 0
      %p123 = por %p121, %p122
      %p124 = scmp.ne.s32.totalorder %s110, %s111
      %p125 = scmp.eq.s32.totalorder %s26, 1
      %p126 = por %p124, %p125
      %p128 = scmp.ne.s32.totalorder %s111, %s127
      %p129 = scmp.eq.s32.totalorder %s26, 0
      %p130 = por %p128, %p129
      %s132 = sadd.s32 %s131, 1
      %p135 = scmp.eq.s32.totalorder %s20, 1
      %p136 = scmp.ne.s32.totalorder %s131, %s133
      %p137 = scmp.eq.s32.totalorder %s20, 0
      %p138 = por %p136, %p137
      %p139 = scmp.ne.s32.totalorder %s131, %s133
      %p140 = scmp.eq.s32.totalorder %s25, 1
      %p141 = por %p139, %p140
      %p142 = scmp.ne.s32.totalorder %s133, %s134
      %p143 = scmp.eq.s32.totalorder %s25, 0
      %p144 = por %p142, %p143
      %p145 = scmp.ne.s32.totalorder %s133, %s134
      %p146 = scmp.eq.s32.totalorder %s26, 1
      %p147 = por %p145, %p146
      %p149 = scmp.ne.s32.totalorder %s134, %s148
      %p150 = scmp.eq.s32.totalorder %s26, 0
      %p151 = por %p149, %p150
      %s153 = sadd.s32 %s152, 1
      %p156 = scmp.eq.s32.totalorder %s20, 1
      %p157 = scmp.ne.s32.totalorder %s152, %s154
      %p158 = scmp.eq.s32.totalorder %s20, 0
      %p159 = por %p157, %p158
      %p160 = scmp.ne.s32.totalorder %s152, %s154
      %p161 = scmp.eq.s32.totalorder %s25, 1
      %p162 = por %p160, %p161
      %p163 = scmp.ne.s32.totalorder %s154, %s155
      %p164 = scmp.eq.s32.totalorder %s25, 0
      %p165 = por %p163, %p164
      %p166 = scmp.ne.s32.totalorder %s154, %s155
      %p167 = scmp.eq.s32.totalorder %s26, 1
      %p168 = por %p166, %p167
      %p170 = scmp.ne.s32.totalorder %s155, %s169
      %p171 = scmp.eq.s32.totalorder %s26, 0
      %p172 = por %p170, %p171
      %s173 = ssub.s32 %s27, %s46
      %s174 = ssub.s32 %s28, %s42
      %s175 = sor.u32 %s173, %s174
      %p176 = scmp.eq.s32.totalorder %s175, 0
      %s178 = sadd.s32 %s177, 1
      %s179 = scalar_select %p176, %s177, %s178
      %p182 = pneg %p176
      %p183 = scmp.eq.s32.totalorder %s20, 1
      %p184 = por %p182, %p183
      %p185 = scmp.ne.s32.totalorder %s177, %s180
      %p186 = scmp.eq.s32.totalorder %s20, 0
      %p187 = por %p185, %p186
      %p188 = scmp.ne.s32.totalorder %s177, %s180
      %p189 = scmp.eq.s32.totalorder %s25, 1
      %p190 = por %p188, %p189
      %p191 = scmp.ne.s32.totalorder %s180, %s181
      %p192 = scmp.eq.s32.totalorder %s25, 0
      %p193 = por %p191, %p192
      %p194 = scmp.ne.s32.totalorder %s180, %s181
      %p195 = scmp.eq.s32.totalorder %s26, 1
      %p196 = por %p194, %p195
      %p198 = scmp.ne.s32.totalorder %s181, %s197
      %p199 = scmp.eq.s32.totalorder %s26, 0
      %p200 = por %p198, %p199
      %p201 = scmp.le.s32.totalorder 1, %s20
      %p202 = scmp.lt.s32.totalorder %s20, 3
      %p203 = pnand %p201, %p202
      %p204 = pneg %p203
      // Predicated region
      $region9: #{tpu_custom_call.1} parent=5 // pred_check
        _
      $region10: #{tpu_custom_call.1} parent=5 // pred_check_branch
        %206 = sbr.rel (%p203) target = $region12
      $region11: #{tpu_custom_call.1} parent=5 // pred_region
        %s207 = ssub.s32 %s20, 1
        // Predicated region
        $region13: #{tpu_custom_call.1} parent=11 // pred_check
          %p208 = pneg %p144
        $region14: #{tpu_custom_call.1} parent=11 // pred_check_branch
          %210 = sbr.rel (%p208) target = $region16
        $region15: #{tpu_custom_call.1} parent=11 // pred_region
          _
        $region16: #{tpu_custom_call.1} parent=11 // pred_fallthru
          _
        // Predicated region
        $region17: #{tpu_custom_call.1} parent=11 // pred_check
          %p211 = pneg %p165
        $region18: #{tpu_custom_call.1} parent=11 // pred_check_branch
          %213 = sbr.rel (%p211) target = $region20
        $region19: #{tpu_custom_call.1} parent=11 // pred_region
          _
        $region20: #{tpu_custom_call.1} parent=11 // pred_fallthru
          _
      $region12: #{tpu_custom_call.1} parent=5 // pred_fallthru
        _
      %p214 = scmp.lt.s32.totalorder %s20, 2
      // Predicated region
      $region21: #{tpu_custom_call.1} parent=5 // pred_check
        %p215 = pneg %p214
      $region22: #{tpu_custom_call.1} parent=5 // pred_check_branch
        %217 = sbr.rel (%p215) target = $region24
      $region23: #{tpu_custom_call.1} parent=5 // pred_region
        // Predicated region
        $region25: #{tpu_custom_call.1} parent=23 // pred_check
          %p218 = pneg %p61
        $region26: #{tpu_custom_call.1} parent=23 // pred_check_branch
          %220 = sbr.rel (%p218) target = $region28
        $region27: #{tpu_custom_call.1} parent=23 // pred_region
          %p221 = scmp.lt.s32.totalorder %s27, 1
          %s222 = scalar_select %p221, %s27, 1
          %p223 = scmp.lt.s32.totalorder %s28, 0
          %s224 = scalar_select %p223, %s28, 0
          %s225 = smul.addr %s222, 4
          %s226 = sadd.s32 %s224, %s225
          %s227 = smul.addr %s226, 8
          %s228 = scalar_lea.vmem %s0, %s227
        $region28: #{tpu_custom_call.1} parent=23 // pred_fallthru
          _
        // Predicated region
        $region29: #{tpu_custom_call.1} parent=23 // pred_check
          %p229 = pneg %p89
        $region30: #{tpu_custom_call.1} parent=23 // pred_check_branch
          %231 = sbr.rel (%p229) target = $region32
        $region31: #{tpu_custom_call.1} parent=23 // pred_region
          %s232 = sand.u32 %s79, 1
          %s233 = scalar_lea.sflag [#allocation6], %s232
          %s234 = sand.u32 %s79, 1
          %s235 = smul.addr %s234, 32
          %s236 = scalar_lea.vmem [#allocation5], %s235
          %s238 = ssub.s32 512, 512
          %239 = vsyncadd %s233, %s238
          %s240 = smul.addr %s27, 4
          %s241 = sadd.s32 %s29, %s240
          %s242 = smul.addr %s241, 128
          %s243 = scalar_lea.hbm %s1, %s242
          %s244 = sshll.u32 %s236, 4
          %s245 = int_to_ptr.vmem [resolvable:$true] %s244
          %250 = dma.hbm_to_vmem [thread:$0]  %s243, 512, %s245, %s233, 128, 128, 8
        $region32: #{tpu_custom_call.1} parent=23 // pred_fallthru
          _
        // Predicated region
        $region33: #{tpu_custom_call.1} parent=23 // pred_check
          %p251 = pneg %p117
        $region34: #{tpu_custom_call.1} parent=23 // pred_check_branch
          %253 = sbr.rel (%p251) target = $region36
        $region35: #{tpu_custom_call.1} parent=23 // pred_region
          %s254 = sand.u32 %s107, 1
          %s255 = scalar_lea.sflag [#allocation9], %s254
          %s256 = sand.u32 %s107, 1
          %s257 = smul.addr %s256, 32
          %s258 = scalar_lea.vmem [#allocation8], %s257
          %s260 = ssub.s32 512, 512
          %261 = vsyncadd %s255, %s260
          %s262 = smul.addr %s27, 4
          %s263 = sadd.s32 %s29, %s262
          %s264 = smul.addr %s263, 128
          %s265 = scalar_lea.hbm %s2, %s264
          %s266 = sshll.u32 %s258, 4
          %s267 = int_to_ptr.vmem [resolvable:$true] %s266
          %272 = dma.hbm_to_vmem [thread:$0]  %s265, 512, %s267, %s255, 128, 128, 8
        $region36: #{tpu_custom_call.1} parent=23 // pred_fallthru
          _
      $region24: #{tpu_custom_call.1} parent=5 // pred_fallthru
        _
      %p273 = scmp.le.s32.totalorder 1, %s20
      %p274 = scmp.lt.s32.totalorder %s20, 3
      %p275 = pnand %p273, %p274
      %p276 = pneg %p275
      // Predicated region
      $region37: #{tpu_custom_call.1} parent=5 // pred_check
        _
      $region38: #{tpu_custom_call.1} parent=5 // pred_check_branch
        %278 = sbr.rel (%p275) target = $region40
      $region39: #{tpu_custom_call.1} parent=5 // pred_region
        %s279 = ssub.s32 %s20, 1
        %s280 = sand.u32 %s82, 1
        %s281 = scalar_lea.sflag [#allocation6], %s280
        %s282 = sand.u32 %s82, 1
        %s283 = smul.addr %s282, 32
        %s284 = scalar_lea.vmem [#allocation5], %s283
        // Predicated region
        $region41: #{tpu_custom_call.1} parent=39 // pred_check
          %p285 = pneg %p95
        $region42: #{tpu_custom_call.1} parent=39 // pred_check_branch
          %287 = sbr.rel (%p285) target = $region44
        $region43: #{tpu_custom_call.1} parent=39 // pred_region
          %288 = dma.done %s281, 512
        $region44: #{tpu_custom_call.1} parent=39 // pred_fallthru
          _
        %s289 = sand.u32 %s110, 1
        %s290 = scalar_lea.sflag [#allocation9], %s289
        %s291 = sand.u32 %s110, 1
        %s292 = smul.addr %s291, 32
        %s293 = scalar_lea.vmem [#allocation8], %s292
        // Predicated region
        $region45: #{tpu_custom_call.1} parent=39 // pred_check
          %p294 = pneg %p123
        $region46: #{tpu_custom_call.1} parent=39 // pred_check_branch
          %296 = sbr.rel (%p294) target = $region48
        $region47: #{tpu_custom_call.1} parent=39 // pred_region
          %297 = dma.done %s290, 512
        $region48: #{tpu_custom_call.1} parent=39 // pred_fallthru
          _
        %p298 = scmp.lt.s32.totalorder %s30, 1
        %s299 = scalar_select %p298, %s30, 1
        %p300 = scmp.lt.s32.totalorder %s31, 0
        %s301 = scalar_select %p300, %s31, 0
        %s302 = smul.addr %s299, 4
        %s303 = sadd.s32 %s301, %s302
        %s304 = smul.addr %s303, 8
        %s305 = scalar_lea.vmem %s0, %s304
        %p306 = pneg %p67
        %p307 = pneg %p64
        %s308 = sand.u32 %s82, 1
        %s309 = scalar_lea.sflag [#allocation6], %s308
        %s310 = sand.u32 %s82, 1
        %s311 = smul.addr %s310, 32
        %s312 = scalar_lea.vmem [#allocation5], %s311
        %p313 = pneg %p95
        %p314 = pneg %p92
        %s315 = sand.u32 %s110, 1
        %s316 = scalar_lea.sflag [#allocation9], %s315
        %s317 = sand.u32 %s110, 1
        %s318 = smul.addr %s317, 32
        %s319 = scalar_lea.vmem [#allocation8], %s318
        %p320 = pneg %p123
        %p321 = pneg %p120
        %p322 = pneg %p144
        %p323 = pneg %p141
        %p324 = pneg %p165
        %p325 = pneg %p162
        %p326 = pneg %p193
        %p327 = pneg %p190
        %s328 = sand.u32 %s180, 1
        %s329 = scalar_lea.sflag [#allocation7], %s328
        %s330 = sand.u32 %s180, 1
        %s331 = smul.addr %s330, 8
        %s332 = scalar_lea.vmem [#allocation10], %s331
        %p333 = scmp.lt.s32.totalorder %s30, 1
        %s334 = scalar_select %p333, %s30, 1
        %p335 = scmp.lt.s32.totalorder %s31, 0
        %s336 = scalar_select %p335, %s31, 0
        %s337 = smul.addr %s334, 4
        %s338 = sadd.s32 %s336, %s337
        %s339 = smul.addr %s338, 8
        %s340 = scalar_lea.vmem %s0, %s339
        %p341 = scmp.eq.s32.totalorder %s32, 0
        // Predicated region
        $region49: #{tpu_custom_call.1} parent=39 // pred_check
          %p342 = pneg %p341
        $region50: #{tpu_custom_call.1} parent=39 // pred_check_branch
          %344 = sbr.rel (%p342) target = $region52
        $region51: #{tpu_custom_call.1} parent=39 // pred_region
          %vm345 = vcmask 7168
          %346 = vst.msk [vmem:[#allocation2] sm:$0xff] %vm345, -inf
          %347 = vst.msk [vmem:[#allocation2 + $0x8] sm:$0xff] %vm345, -inf
          %348 = vst.msk [vmem:[#allocation2 + $0x10] sm:$0xff] %vm345, -inf
          %349 = vst.msk [vmem:[#allocation2 + $0x18] sm:$0xff] %vm345, -inf
          %350 = vst.msk [vmem:[#allocation3] sm:$0xff] %vm345, 0.0
          %351 = vst.msk [vmem:[#allocation3 + $0x8] sm:$0xff] %vm345, 0.0
          %352 = vst.msk [vmem:[#allocation3 + $0x10] sm:$0xff] %vm345, 0.0
          %353 = vst.msk [vmem:[#allocation3 + $0x18] sm:$0xff] %vm345, 0.0
          %vm354 = vcmask 130048
          %355 = vst.msk [vmem:[#allocation4] sm:$0xff] %vm354, 0.0
          %356 = vst.msk [vmem:[#allocation4 + $0x8] sm:$0xff] %vm354, 0.0
          %357 = vst.msk [vmem:[#allocation4 + $0x10] sm:$0xff] %vm354, 0.0
          %358 = vst.msk [vmem:[#allocation4 + $0x18] sm:$0xff] %vm354, 0.0
        $region52: #{tpu_custom_call.1} parent=39 // pred_fallthru
          _
        %v359 = vld [vmem:[%s340] sm:$0xff]
        %v360 = vld [vmem:[%s340 + $0x8] sm:$0xff]
        %v361 = vld [vmem:[%s340 + $0x10] sm:$0xff]
        %v362 = vld [vmem:[%s340 + $0x18] sm:$0xff]
        %v363 = vld [vmem:[%s284] sm:$0xff]
        %v364 = vld [vmem:[%s284 + $0x8] sm:$0xff]
        %v365 = vld [vmem:[%s284 + $0x10] sm:$0xff]
        %v366 = vld [vmem:[%s284 + $0x18] sm:$0xff]
        %v367 = vld [vmem:[%s293] sm:$0xff]
        %v368 = vld [vmem:[%s293 + $0x8] sm:$0xff]
        %v369 = vld [vmem:[%s293 + $0x10] sm:$0xff]
        %v370 = vld [vmem:[%s293 + $0x18] sm:$0xff]
        %vm371 = vcmask 130048
        %v373 = vsel %vm371, %v359, 0
        %v376 = vsel %vm371, %v363, 0
        %378 = vmatprep.subr.mxu0 0.0
        %379 = vmatpush1.xpose.msra.mxu0 0.0
        %380 = vmatprep.subr.mxu0 0.0
        %381 = vmatpush1.xpose.msra.mxu0 0.0
        %382 = vmatprep.subr.mxu0 0.0
        %383 = vmatpush1.xpose.msra.mxu0 0.0
        %384 = vmatprep.subr.mxu0 0.0
        %385 = vmatpush1.xpose.msra.mxu0 0.0
        %386 = vmatprep.subr.mxu0 0.0
        %387 = vmatpush1.xpose.msra.mxu0 0.0
        %388 = vmatprep.subr.mxu0 0.0
        %389 = vmatpush1.xpose.msra.mxu0 0.0
        %390 = vmatprep.subr.mxu0 0.0
        %391 = vmatpush1.xpose.msra.mxu0 0.0
        %392 = vmatprep.subr.mxu0 0.0
        %393 = vmatpush1.xpose.msra.mxu0 0.0
        %394 = vmatprep.subr.mxu0 0.0
        %395 = vmatpush1.xpose.msra.mxu0 0.0
        %396 = vmatprep.subr.mxu0 0.0
        %397 = vmatpush1.xpose.msra.mxu0 0.0
        %398 = vmatprep.subr.mxu0 0.0
        %399 = vmatpush1.xpose.msra.mxu0 0.0
        %400 = vmatprep.subr.mxu0 0.0
        %401 = vmatpush1.xpose.msra.mxu0 0.0
        %402 = vmatprep.subr.mxu0 0.0
        %403 = vmatpush1.xpose.msra.mxu0 0.0
        %404 = vmatprep.subr.mxu0 0.0
        %405 = vmatpush1.xpose.msra.mxu0 0.0
        %406 = vmatprep.subr.mxu0 0.0
        %407 = vmatpush1.xpose.msra.mxu0 0.0
        %408 = vmatprep.subr.mxu0 0.0
        %409 = vmatpush1.xpose.msra.mxu0 %v376
        %410 = vmatprep.subr.mxu0 0.0
        %411 = vmatpush2.xpose.msra.mxu0 0.0
        %412 = vmatprep.subr.mxu0 0.0
        %413 = vmatpush2.xpose.msra.mxu0 0.0
        %414 = vmatprep.subr.mxu0 0.0
        %415 = vmatpush2.xpose.msra.mxu0 0.0
        %416 = vmatprep.subr.mxu0 0.0
        %417 = vmatpush2.xpose.msra.mxu0 0.0
        %418 = vmatprep.subr.mxu0 0.0
        %419 = vmatpush2.xpose.msra.mxu0 0.0
        %420 = vmatprep.subr.mxu0 0.0
        %421 = vmatpush2.xpose.msra.mxu0 0.0
        %422 = vmatprep.subr.mxu0 0.0
        %423 = vmatpush2.xpose.msra.mxu0 0.0
        %424 = vmatprep.subr.mxu0 0.0
        %425 = vmatpush2.xpose.msra.mxu0 0.0
        %426 = vmatprep.subr.mxu0 0.0
        %427 = vmatpush2.xpose.msra.mxu0 0.0
        %428 = vmatprep.subr.mxu0 0.0
        %429 = vmatpush2.xpose.msra.mxu0 0.0
        %430 = vmatprep.subr.mxu0 0.0
        %431 = vmatpush2.xpose.msra.mxu0 0.0
        %432 = vmatprep.subr.mxu0 0.0
        %433 = vmatpush2.xpose.msra.mxu0 0.0
        %434 = vmatprep.subr.mxu0 0.0
        %435 = vmatpush2.xpose.msra.mxu0 0.0
        %436 = vmatprep.subr.mxu0 0.0
        %437 = vmatpush2.xpose.msra.mxu0 0.0
        %438 = vmatprep.subr.mxu0 0.0
        %439 = vmatpush2.xpose.msra.mxu0 0.0
        %440 = vmatprep.subr.mxu0 0.0
        %441 = vmatpush2.xpose.msra.mxu0 0.0
        %442 = vmatprep.mubr.f32.mxu0 0.0
        %443 = vmatmul.mubr.f32.gmra.mxu0 %v373
        %v444 = vpop.f32.mrf.mxu0
        %v445 = vadd.f32 0.0, %v444
        %v446 = vpop.f32.mrf.mxu0
        %447 = vdwg.mxu0
        %v449 = vsel %vm371, %v360, 0
        %v452 = vsel %vm371, %v364, 0
        %454 = vmatprep.subr.mxu0 0.0
        %455 = vmatpush1.xpose.msra.mxu0 0.0
        %456 = vmatprep.subr.mxu0 0.0
        %457 = vmatpush1.xpose.msra.mxu0 0.0
        %458 = vmatprep.subr.mxu0 0.0
        %459 = vmatpush1.xpose.msra.mxu0 0.0
        %460 = vmatprep.subr.mxu0 0.0
        %461 = vmatpush1.xpose.msra.mxu0 0.0
        %462 = vmatprep.subr.mxu0 0.0
        %463 = vmatpush1.xpose.msra.mxu0 0.0
        %464 = vmatprep.subr.mxu0 0.0
        %465 = vmatpush1.xpose.msra.mxu0 0.0
        %466 = vmatprep.subr.mxu0 0.0
        %467 = vmatpush1.xpose.msra.mxu0 0.0
        %468 = vmatprep.subr.mxu0 0.0
        %469 = vmatpush1.xpose.msra.mxu0 0.0
        %470 = vmatprep.subr.mxu0 0.0
        %471 = vmatpush1.xpose.msra.mxu0 0.0
        %472 = vmatprep.subr.mxu0 0.0
        %473 = vmatpush1.xpose.msra.mxu0 0.0
        %474 = vmatprep.subr.mxu0 0.0
        %475 = vmatpush1.xpose.msra.mxu0 0.0
        %476 = vmatprep.subr.mxu0 0.0
        %477 = vmatpush1.xpose.msra.mxu0 0.0
        %478 = vmatprep.subr.mxu0 0.0
        %479 = vmatpush1.xpose.msra.mxu0 0.0
        %480 = vmatprep.subr.mxu0 0.0
        %481 = vmatpush1.xpose.msra.mxu0 0.0
        %482 = vmatprep.subr.mxu0 0.0
        %483 = vmatpush1.xpose.msra.mxu0 0.0
        %484 = vmatprep.subr.mxu0 0.0
        %485 = vmatpush1.xpose.msra.mxu0 %v452
        %486 = vmatprep.subr.mxu0 0.0
        %487 = vmatpush2.xpose.msra.mxu0 0.0
        %488 = vmatprep.subr.mxu0 0.0
        %489 = vmatpush2.xpose.msra.mxu0 0.0
        %490 = vmatprep.subr.mxu0 0.0
        %491 = vmatpush2.xpose.msra.mxu0 0.0
        %492 = vmatprep.subr.mxu0 0.0
        %493 = vmatpush2.xpose.msra.mxu0 0.0
        %494 = vmatprep.subr.mxu0 0.0
        %495 = vmatpush2.xpose.msra.mxu0 0.0
        %496 = vmatprep.subr.mxu0 0.0
        %497 = vmatpush2.xpose.msra.mxu0 0.0
        %498 = vmatprep.subr.mxu0 0.0
        %499 = vmatpush2.xpose.msra.mxu0 0.0
        %500 = vmatprep.subr.mxu0 0.0
        %501 = vmatpush2.xpose.msra.mxu0 0.0
        %502 = vmatprep.subr.mxu0 0.0
        %503 = vmatpush2.xpose.msra.mxu0 0.0
        %504 = vmatprep.subr.mxu0 0.0
        %505 = vmatpush2.xpose.msra.mxu0 0.0
        %506 = vmatprep.subr.mxu0 0.0
        %507 = vmatpush2.xpose.msra.mxu0 0.0
        %508 = vmatprep.subr.mxu0 0.0
        %509 = vmatpush2.xpose.msra.mxu0 0.0
        %510 = vmatprep.subr.mxu0 0.0
        %511 = vmatpush2.xpose.msra.mxu0 0.0
        %512 = vmatprep.subr.mxu0 0.0
        %513 = vmatpush2.xpose.msra.mxu0 0.0
        %514 = vmatprep.subr.mxu0 0.0
        %515 = vmatpush2.xpose.msra.mxu0 0.0
        %516 = vmatprep.subr.mxu0 0.0
        %517 = vmatpush2.xpose.msra.mxu0 0.0
        %518 = vmatprep.mubr.f32.mxu0 0.0
        %519 = vmatmul.mubr.f32.gmra.mxu0 %v449
        %v520 = vpop.f32.mrf.mxu0
        %v521 = vadd.f32 0.0, %v520
        %v522 = vpop.f32.mrf.mxu0
        %523 = vdwg.mxu0
        %v525 = vsel %vm371, %v361, 0
        %v528 = vsel %vm371, %v365, 0
        %530 = vmatprep.subr.mxu0 0.0
        %531 = vmatpush1.xpose.msra.mxu0 0.0
        %532 = vmatprep.subr.mxu0 0.0
        %533 = vmatpush1.xpose.msra.mxu0 0.0
        %534 = vmatprep.subr.mxu0 0.0
        %535 = vmatpush1.xpose.msra.mxu0 0.0
        %536 = vmatprep.subr.mxu0 0.0
        %537 = vmatpush1.xpose.msra.mxu0 0.0
        %538 = vmatprep.subr.mxu0 0.0
        %539 = vmatpush1.xpose.msra.mxu0 0.0
        %540 = vmatprep.subr.mxu0 0.0
        %541 = vmatpush1.xpose.msra.mxu0 0.0
        %542 = vmatprep.subr.mxu0 0.0
        %543 = vmatpush1.xpose.msra.mxu0 0.0
        %544 = vmatprep.subr.mxu0 0.0
        %545 = vmatpush1.xpose.msra.mxu0 0.0
        %546 = vmatprep.subr.mxu0 0.0
        %547 = vmatpush1.xpose.msra.mxu0 0.0
        %548 = vmatprep.subr.mxu0 0.0
        %549 = vmatpush1.xpose.msra.mxu0 0.0
        %550 = vmatprep.subr.mxu0 0.0
        %551 = vmatpush1.xpose.msra.mxu0 0.0
        %552 = vmatprep.subr.mxu0 0.0
        %553 = vmatpush1.xpose.msra.mxu0 0.0
        %554 = vmatprep.subr.mxu0 0.0
        %555 = vmatpush1.xpose.msra.mxu0 0.0
        %556 = vmatprep.subr.mxu0 0.0
        %557 = vmatpush1.xpose.msra.mxu0 0.0
        %558 = vmatprep.subr.mxu0 0.0
        %559 = vmatpush1.xpose.msra.mxu0 0.0
        %560 = vmatprep.subr.mxu0 0.0
        %561 = vmatpush1.xpose.msra.mxu0 %v528
        %562 = vmatprep.subr.mxu0 0.0
        %563 = vmatpush2.xpose.msra.mxu0 0.0
        %564 = vmatprep.subr.mxu0 0.0
        %565 = vmatpush2.xpose.msra.mxu0 0.0
        %566 = vmatprep.subr.mxu0 0.0
        %567 = vmatpush2.xpose.msra.mxu0 0.0
        %568 = vmatprep.subr.mxu0 0.0
        %569 = vmatpush2.xpose.msra.mxu0 0.0
        %570 = vmatprep.subr.mxu0 0.0
        %571 = vmatpush2.xpose.msra.mxu0 0.0
        %572 = vmatprep.subr.mxu0 0.0
        %573 = vmatpush2.xpose.msra.mxu0 0.0
        %574 = vmatprep.subr.mxu0 0.0
        %575 = vmatpush2.xpose.msra.mxu0 0.0
        %576 = vmatprep.subr.mxu0 0.0
        %577 = vmatpush2.xpose.msra.mxu0 0.0
        %578 = vmatprep.subr.mxu0 0.0
        %579 = vmatpush2.xpose.msra.mxu0 0.0
        %580 = vmatprep.subr.mxu0 0.0
        %581 = vmatpush2.xpose.msra.mxu0 0.0
        %582 = vmatprep.subr.mxu0 0.0
        %583 = vmatpush2.xpose.msra.mxu0 0.0
        %584 = vmatprep.subr.mxu0 0.0
        %585 = vmatpush2.xpose.msra.mxu0 0.0
        %586 = vmatprep.subr.mxu0 0.0
        %587 = vmatpush2.xpose.msra.mxu0 0.0
        %588 = vmatprep.subr.mxu0 0.0
        %589 = vmatpush2.xpose.msra.mxu0 0.0
        %590 = vmatprep.subr.mxu0 0.0
        %591 = vmatpush2.xpose.msra.mxu0 0.0
        %592 = vmatprep.subr.mxu0 0.0
        %593 = vmatpush2.xpose.msra.mxu0 0.0
        %594 = vmatprep.mubr.f32.mxu0 0.0
        %595 = vmatmul.mubr.f32.gmra.mxu0 %v525
        %v596 = vpop.f32.mrf.mxu0
        %v597 = vadd.f32 0.0, %v596
        %v598 = vpop.f32.mrf.mxu0
        %599 = vdwg.mxu0
        %v601 = vsel %vm371, %v362, 0
        %v604 = vsel %vm371, %v366, 0
        %606 = vmatprep.subr.mxu0 0.0
        %607 = vmatpush1.xpose.msra.mxu0 0.0
        %608 = vmatprep.subr.mxu0 0.0
        %609 = vmatpush1.xpose.msra.mxu0 0.0
        %610 = vmatprep.subr.mxu0 0.0
        %611 = vmatpush1.xpose.msra.mxu0 0.0
        %612 = vmatprep.subr.mxu0 0.0
        %613 = vmatpush1.xpose.msra.mxu0 0.0
        %614 = vmatprep.subr.mxu0 0.0
        %615 = vmatpush1.xpose.msra.mxu0 0.0
        %616 = vmatprep.subr.mxu0 0.0
        %617 = vmatpush1.xpose.msra.mxu0 0.0
        %618 = vmatprep.subr.mxu0 0.0
        %619 = vmatpush1.xpose.msra.mxu0 0.0
        %620 = vmatprep.subr.mxu0 0.0
        %621 = vmatpush1.xpose.msra.mxu0 0.0
        %622 = vmatprep.subr.mxu0 0.0
        %623 = vmatpush1.xpose.msra.mxu0 0.0
        %624 = vmatprep.subr.mxu0 0.0
        %625 = vmatpush1.xpose.msra.mxu0 0.0
        %626 = vmatprep.subr.mxu0 0.0
        %627 = vmatpush1.xpose.msra.mxu0 0.0
        %628 = vmatprep.subr.mxu0 0.0
        %629 = vmatpush1.xpose.msra.mxu0 0.0
        %630 = vmatprep.subr.mxu0 0.0
        %631 = vmatpush1.xpose.msra.mxu0 0.0
        %632 = vmatprep.subr.mxu0 0.0
        %633 = vmatpush1.xpose.msra.mxu0 0.0
        %634 = vmatprep.subr.mxu0 0.0
        %635 = vmatpush1.xpose.msra.mxu0 0.0
        %636 = vmatprep.subr.mxu0 0.0
        %637 = vmatpush1.xpose.msra.mxu0 %v604
        %638 = vmatprep.subr.mxu0 0.0
        %639 = vmatpush2.xpose.msra.mxu0 0.0
        %640 = vmatprep.subr.mxu0 0.0
        %641 = vmatpush2.xpose.msra.mxu0 0.0
        %642 = vmatprep.subr.mxu0 0.0
        %643 = vmatpush2.xpose.msra.mxu0 0.0
        %644 = vmatprep.subr.mxu0 0.0
        %645 = vmatpush2.xpose.msra.mxu0 0.0
        %646 = vmatprep.subr.mxu0 0.0
        %647 = vmatpush2.xpose.msra.mxu0 0.0
        %648 = vmatprep.subr.mxu0 0.0
        %649 = vmatpush2.xpose.msra.mxu0 0.0
        %650 = vmatprep.subr.mxu0 0.0
        %651 = vmatpush2.xpose.msra.mxu0 0.0
        %652 = vmatprep.subr.mxu0 0.0
        %653 = vmatpush2.xpose.msra.mxu0 0.0
        %654 = vmatprep.subr.mxu0 0.0
        %655 = vmatpush2.xpose.msra.mxu0 0.0
        %656 = vmatprep.subr.mxu0 0.0
        %657 = vmatpush2.xpose.msra.mxu0 0.0
        %658 = vmatprep.subr.mxu0 0.0
        %659 = vmatpush2.xpose.msra.mxu0 0.0
        %660 = vmatprep.subr.mxu0 0.0
        %661 = vmatpush2.xpose.msra.mxu0 0.0
        %662 = vmatprep.subr.mxu0 0.0
        %663 = vmatpush2.xpose.msra.mxu0 0.0
        %664 = vmatprep.subr.mxu0 0.0
        %665 = vmatpush2.xpose.msra.mxu0 0.0
        %666 = vmatprep.subr.mxu0 0.0
        %667 = vmatpush2.xpose.msra.mxu0 0.0
        %668 = vmatprep.subr.mxu0 0.0
        %669 = vmatpush2.xpose.msra.mxu0 0.0
        %670 = vmatprep.mubr.f32.mxu0 0.0
        %671 = vmatmul.mubr.f32.gmra.mxu0 %v601
        %v672 = vpop.f32.mrf.mxu0
        %v673 = vadd.f32 0.0, %v672
        %v674 = vpop.f32.mrf.mxu0
        %675 = vdwg.mxu0
        %v676 = vld [vmem:[#allocation2] sm:$0xff]
        %v677 = vld [vmem:[#allocation2 + $0x8] sm:$0xff]
        %v678 = vld [vmem:[#allocation2 + $0x10] sm:$0xff]
        %v679 = vld [vmem:[#allocation2 + $0x18] sm:$0xff]
        %vm680 = vcmask 64512
        %v681 = vsel %vm680, %v445, -inf
        %682 = vmax.xlane.f32.xlu0 %v681
        %v683 = vpop.xlane.xlu0 %682
        %v684 = vsel %vm680, %v521, -inf
        %685 = vmax.xlane.f32.xlu0 %v684
        %v686 = vpop.xlane.xlu0 %685
        %v687 = vsel %vm680, %v597, -inf
        %688 = vmax.xlane.f32.xlu0 %v687
        %v689 = vpop.xlane.xlu0 %688
        %v690 = vsel %vm680, %v673, -inf
        %691 = vmax.xlane.f32.xlu0 %v690
        %v692 = vpop.xlane.xlu0 %691
        %v693 = vmax.f32 %v676, %v683
        %v694 = vmax.f32 %v677, %v686
        %v695 = vmax.f32 %v678, %v689
        %v696 = vmax.f32 %v679, %v692
        %v697 = vsub.f32 %v676, %v693
        %v698 = vsub.f32 %v677, %v694
        %v699 = vsub.f32 %v678, %v695
        %v700 = vsub.f32 %v679, %v696
        %v701 = vmul.f32 %v697, 1.442695
        %v702 = vpow.pop %v701
        %v703 = vmul.f32 %v698, 1.442695
        %v704 = vpow.pop %v703
        %v705 = vmul.f32 %v699, 1.442695
        %v706 = vpow.pop %v705
        %v707 = vmul.f32 %v700, 1.442695
        %v708 = vpow.pop %v707
        %710 = vset.pattern.permute.xlu0 0
        %711 = vperm.xlu0 %710, %v693
        %v712 = vpop.permute.xlu0 %711
        %715 = vset.pattern.permute.xlu0 0
        %716 = vperm.xlu0 %715, %v694
        %v717 = vpop.permute.xlu0 %716
        %720 = vset.pattern.permute.xlu0 0
        %721 = vperm.xlu0 %720, %v695
        %v722 = vpop.permute.xlu0 %721
        %725 = vset.pattern.permute.xlu0 0
        %726 = vperm.xlu0 %725, %v696
        %v727 = vpop.permute.xlu0 %726
        %v729 = vsub.f32 %v445, %v712
        %v730 = vsub.f32 %v521, %v717
        %v731 = vsub.f32 %v597, %v722
        %v732 = vsub.f32 %v673, %v727
        %v733 = vmul.f32 %v729, 1.442695
        %v734 = vpow.pop %v733
        %v735 = vmul.f32 %v730, 1.442695
        %v736 = vpow.pop %v735
        %v737 = vmul.f32 %v731, 1.442695
        %v738 = vpow.pop %v737
        %v739 = vmul.f32 %v732, 1.442695
        %v740 = vpow.pop %v739
        %v741 = vld [vmem:[#allocation3] sm:$0xff]
        %v742 = vld [vmem:[#allocation3 + $0x8] sm:$0xff]
        %v743 = vld [vmem:[#allocation3 + $0x10] sm:$0xff]
        %v744 = vld [vmem:[#allocation3 + $0x18] sm:$0xff]
        %v745 = vmul.f32 %v702, %v741
        %v746 = vmul.f32 %v704, %v742
        %v747 = vmul.f32 %v706, %v743
        %v748 = vmul.f32 %v708, %v744
        %v749 = vsel %vm680, %v734, 0.0
        %750 = vadd.xlane.f32.xlu0 %v749
        %v751 = vpop.xlane.xlu0 %750
        %v752 = vsel %vm680, %v736, 0.0
        %753 = vadd.xlane.f32.xlu0 %v752
        %v754 = vpop.xlane.xlu0 %753
        %v755 = vsel %vm680, %v738, 0.0
        %756 = vadd.xlane.f32.xlu0 %v755
        %v757 = vpop.xlane.xlu0 %756
        %v758 = vsel %vm680, %v740, 0.0
        %759 = vadd.xlane.f32.xlu0 %v758
        %v760 = vpop.xlane.xlu0 %759
        %v761 = vadd.f32 %v745, %v751
        %v762 = vadd.f32 %v746, %v754
        %v763 = vadd.f32 %v747, %v757
        %v764 = vadd.f32 %v748, %v760
        %vm765 = vcmask 7168
        %766 = vst.msk [vmem:[#allocation3] sm:$0xff] %vm765, %v761
        %767 = vst.msk [vmem:[#allocation3 + $0x8] sm:$0xff] %vm765, %v762
        %768 = vst.msk [vmem:[#allocation3 + $0x10] sm:$0xff] %vm765, %v763
        %769 = vst.msk [vmem:[#allocation3 + $0x18] sm:$0xff] %vm765, %v764
        %v770 = vld [vmem:[#allocation4] sm:$0xff]
        %v771 = vld [vmem:[#allocation4 + $0x8] sm:$0xff]
        %v772 = vld [vmem:[#allocation4 + $0x10] sm:$0xff]
        %v773 = vld [vmem:[#allocation4 + $0x18] sm:$0xff]
        %775 = vset.pattern.permute.xlu0 0
        %776 = vperm.xlu0 %775, %v702
        %v777 = vpop.permute.xlu0 %776
        %780 = vset.pattern.permute.xlu0 0
        %781 = vperm.xlu0 %780, %v704
        %v782 = vpop.permute.xlu0 %781
        %785 = vset.pattern.permute.xlu0 0
        %786 = vperm.xlu0 %785, %v706
        %v787 = vpop.permute.xlu0 %786
        %790 = vset.pattern.permute.xlu0 0
        %791 = vperm.xlu0 %790, %v708
        %v792 = vpop.permute.xlu0 %791
        %v794 = vmul.f32 %v777, %v770
        %v795 = vmul.f32 %v782, %v771
        %v796 = vmul.f32 %v787, %v772
        %v797 = vmul.f32 %v792, %v773
        %v799 = vsel %vm680, %v734, 0
        %801 = vmatprep.subr.mxu0 0.0
        %802 = vmatpush1.msra.mxu0 0.0
        %803 = vmatprep.subr.mxu0 0.0
        %804 = vmatpush1.msra.mxu0 0.0
        %805 = vmatprep.subr.mxu0 0.0
        %806 = vmatpush1.msra.mxu0 0.0
        %807 = vmatprep.subr.mxu0 0.0
        %808 = vmatpush1.msra.mxu0 0.0
        %809 = vmatprep.subr.mxu0 0.0
        %810 = vmatpush1.msra.mxu0 0.0
        %811 = vmatprep.subr.mxu0 0.0
        %812 = vmatpush1.msra.mxu0 0.0
        %813 = vmatprep.subr.mxu0 0.0
        %814 = vmatpush1.msra.mxu0 0.0
        %815 = vmatprep.subr.mxu0 0.0
        %816 = vmatpush1.msra.mxu0 0.0
        %817 = vmatprep.subr.mxu0 0.0
        %818 = vmatpush1.msra.mxu0 0.0
        %819 = vmatprep.subr.mxu0 0.0
        %820 = vmatpush1.msra.mxu0 0.0
        %821 = vmatprep.subr.mxu0 0.0
        %822 = vmatpush1.msra.mxu0 0.0
        %823 = vmatprep.subr.mxu0 0.0
        %824 = vmatpush1.msra.mxu0 0.0
        %825 = vmatprep.subr.mxu0 0.0
        %826 = vmatpush1.msra.mxu0 0.0
        %827 = vmatprep.subr.mxu0 0.0
        %828 = vmatpush1.msra.mxu0 0.0
        %829 = vmatprep.subr.mxu0 0.0
        %830 = vmatpush1.msra.mxu0 0.0
        %831 = vmatprep.subr.mxu0 0.0
        %832 = vmatpush1.msra.mxu0 %v367
        %833 = vmatprep.subr.mxu0 0.0
        %834 = vmatpush2.msra.mxu0 0.0
        %835 = vmatprep.subr.mxu0 0.0
        %836 = vmatpush2.msra.mxu0 0.0
        %837 = vmatprep.subr.mxu0 0.0
        %838 = vmatpush2.msra.mxu0 0.0
        %839 = vmatprep.subr.mxu0 0.0
        %840 = vmatpush2.msra.mxu0 0.0
        %841 = vmatprep.subr.mxu0 0.0
        %842 = vmatpush2.msra.mxu0 0.0
        %843 = vmatprep.subr.mxu0 0.0
        %844 = vmatpush2.msra.mxu0 0.0
        %845 = vmatprep.subr.mxu0 0.0
        %846 = vmatpush2.msra.mxu0 0.0
        %847 = vmatprep.subr.mxu0 0.0
        %848 = vmatpush2.msra.mxu0 0.0
        %849 = vmatprep.subr.mxu0 0.0
        %850 = vmatpush2.msra.mxu0 0.0
        %851 = vmatprep.subr.mxu0 0.0
        %852 = vmatpush2.msra.mxu0 0.0
        %853 = vmatprep.subr.mxu0 0.0
        %854 = vmatpush2.msra.mxu0 0.0
        %855 = vmatprep.subr.mxu0 0.0
        %856 = vmatpush2.msra.mxu0 0.0
        %857 = vmatprep.subr.mxu0 0.0
        %858 = vmatpush2.msra.mxu0 0.0
        %859 = vmatprep.subr.mxu0 0.0
        %860 = vmatpush2.msra.mxu0 0.0
        %861 = vmatprep.subr.mxu0 0.0
        %862 = vmatpush2.msra.mxu0 0.0
        %863 = vmatprep.subr.mxu0 0.0
        %864 = vmatpush2.msra.mxu0 0.0
        %865 = vmatprep.mubr.f32.mxu0 0.0
        %866 = vmatmul.mubr.f32.gmra.mxu0 %v799
        %v867 = vpop.f32.mrf.mxu0
        %v868 = vadd.f32 0.0, %v867
        %v869 = vpop.f32.mrf.mxu0
        %870 = vdwg.mxu0
        %v872 = vsel %vm680, %v736, 0
        %874 = vmatprep.subr.mxu0 0.0
        %875 = vmatpush1.msra.mxu0 0.0
        %876 = vmatprep.subr.mxu0 0.0
        %877 = vmatpush1.msra.mxu0 0.0
        %878 = vmatprep.subr.mxu0 0.0
        %879 = vmatpush1.msra.mxu0 0.0
        %880 = vmatprep.subr.mxu0 0.0
        %881 = vmatpush1.msra.mxu0 0.0
        %882 = vmatprep.subr.mxu0 0.0
        %883 = vmatpush1.msra.mxu0 0.0
        %884 = vmatprep.subr.mxu0 0.0
        %885 = vmatpush1.msra.mxu0 0.0
        %886 = vmatprep.subr.mxu0 0.0
        %887 = vmatpush1.msra.mxu0 0.0
        %888 = vmatprep.subr.mxu0 0.0
        %889 = vmatpush1.msra.mxu0 0.0
        %890 = vmatprep.subr.mxu0 0.0
        %891 = vmatpush1.msra.mxu0 0.0
        %892 = vmatprep.subr.mxu0 0.0
        %893 = vmatpush1.msra.mxu0 0.0
        %894 = vmatprep.subr.mxu0 0.0
        %895 = vmatpush1.msra.mxu0 0.0
        %896 = vmatprep.subr.mxu0 0.0
        %897 = vmatpush1.msra.mxu0 0.0
        %898 = vmatprep.subr.mxu0 0.0
        %899 = vmatpush1.msra.mxu0 0.0
        %900 = vmatprep.subr.mxu0 0.0
        %901 = vmatpush1.msra.mxu0 0.0
        %902 = vmatprep.subr.mxu0 0.0
        %903 = vmatpush1.msra.mxu0 0.0
        %904 = vmatprep.subr.mxu0 0.0
        %905 = vmatpush1.msra.mxu0 %v368
        %906 = vmatprep.subr.mxu0 0.0
        %907 = vmatpush2.msra.mxu0 0.0
        %908 = vmatprep.subr.mxu0 0.0
        %909 = vmatpush2.msra.mxu0 0.0
        %910 = vmatprep.subr.mxu0 0.0
        %911 = vmatpush2.msra.mxu0 0.0
        %912 = vmatprep.subr.mxu0 0.0
        %913 = vmatpush2.msra.mxu0 0.0
        %914 = vmatprep.subr.mxu0 0.0
        %915 = vmatpush2.msra.mxu0 0.0
        %916 = vmatprep.subr.mxu0 0.0
        %917 = vmatpush2.msra.mxu0 0.0
        %918 = vmatprep.subr.mxu0 0.0
        %919 = vmatpush2.msra.mxu0 0.0
        %920 = vmatprep.subr.mxu0 0.0
        %921 = vmatpush2.msra.mxu0 0.0
        %922 = vmatprep.subr.mxu0 0.0
        %923 = vmatpush2.msra.mxu0 0.0
        %924 = vmatprep.subr.mxu0 0.0
        %925 = vmatpush2.msra.mxu0 0.0
        %926 = vmatprep.subr.mxu0 0.0
        %927 = vmatpush2.msra.mxu0 0.0
        %928 = vmatprep.subr.mxu0 0.0
        %929 = vmatpush2.msra.mxu0 0.0
        %930 = vmatprep.subr.mxu0 0.0
        %931 = vmatpush2.msra.mxu0 0.0
        %932 = vmatprep.subr.mxu0 0.0
        %933 = vmatpush2.msra.mxu0 0.0
        %934 = vmatprep.subr.mxu0 0.0
        %935 = vmatpush2.msra.mxu0 0.0
        %936 = vmatprep.subr.mxu0 0.0
        %937 = vmatpush2.msra.mxu0 0.0
        %938 = vmatprep.mubr.f32.mxu0 0.0
        %939 = vmatmul.mubr.f32.gmra.mxu0 %v872
        %v940 = vpop.f32.mrf.mxu0
        %v941 = vadd.f32 0.0, %v940
        %v942 = vpop.f32.mrf.mxu0
        %943 = vdwg.mxu0
        %v945 = vsel %vm680, %v738, 0
        %947 = vmatprep.subr.mxu0 0.0
        %948 = vmatpush1.msra.mxu0 0.0
        %949 = vmatprep.subr.mxu0 0.0
        %950 = vmatpush1.msra.mxu0 0.0
        %951 = vmatprep.subr.mxu0 0.0
        %952 = vmatpush1.msra.mxu0 0.0
        %953 = vmatprep.subr.mxu0 0.0
        %954 = vmatpush1.msra.mxu0 0.0
        %955 = vmatprep.subr.mxu0 0.0
        %956 = vmatpush1.msra.mxu0 0.0
        %957 = vmatprep.subr.mxu0 0.0
        %958 = vmatpush1.msra.mxu0 0.0
        %959 = vmatprep.subr.mxu0 0.0
        %960 = vmatpush1.msra.mxu0 0.0
        %961 = vmatprep.subr.mxu0 0.0
        %962 = vmatpush1.msra.mxu0 0.0
        %963 = vmatprep.subr.mxu0 0.0
        %964 = vmatpush1.msra.mxu0 0.0
        %965 = vmatprep.subr.mxu0 0.0
        %966 = vmatpush1.msra.mxu0 0.0
        %967 = vmatprep.subr.mxu0 0.0
        %968 = vmatpush1.msra.mxu0 0.0
        %969 = vmatprep.subr.mxu0 0.0
        %970 = vmatpush1.msra.mxu0 0.0
        %971 = vmatprep.subr.mxu0 0.0
        %972 = vmatpush1.msra.mxu0 0.0
        %973 = vmatprep.subr.mxu0 0.0
        %974 = vmatpush1.msra.mxu0 0.0
        %975 = vmatprep.subr.mxu0 0.0
        %976 = vmatpush1.msra.mxu0 0.0
        %977 = vmatprep.subr.mxu0 0.0
        %978 = vmatpush1.msra.mxu0 %v369
        %979 = vmatprep.subr.mxu0 0.0
        %980 = vmatpush2.msra.mxu0 0.0
        %981 = vmatprep.subr.mxu0 0.0
        %982 = vmatpush2.msra.mxu0 0.0
        %983 = vmatprep.subr.mxu0 0.0
        %984 = vmatpush2.msra.mxu0 0.0
        %985 = vmatprep.subr.mxu0 0.0
        %986 = vmatpush2.msra.mxu0 0.0
        %987 = vmatprep.subr.mxu0 0.0
        %988 = vmatpush2.msra.mxu0 0.0
        %989 = vmatprep.subr.mxu0 0.0
        %990 = vmatpush2.msra.mxu0 0.0
        %991 = vmatprep.subr.mxu0 0.0
        %992 = vmatpush2.msra.mxu0 0.0
        %993 = vmatprep.subr.mxu0 0.0
        %994 = vmatpush2.msra.mxu0 0.0
        %995 = vmatprep.subr.mxu0 0.0
        %996 = vmatpush2.msra.mxu0 0.0
        %997 = vmatprep.subr.mxu0 0.0
        %998 = vmatpush2.msra.mxu0 0.0
        %999 = vmatprep.subr.mxu0 0.0
        %1000 = vmatpush2.msra.mxu0 0.0
        %1001 = vmatprep.subr.mxu0 0.0
        %1002 = vmatpush2.msra.mxu0 0.0
        %1003 = vmatprep.subr.mxu0 0.0
        %1004 = vmatpush2.msra.mxu0 0.0
        %1005 = vmatprep.subr.mxu0 0.0
        %1006 = vmatpush2.msra.mxu0 0.0
        %1007 = vmatprep.subr.mxu0 0.0
        %1008 = vmatpush2.msra.mxu0 0.0
        %1009 = vmatprep.subr.mxu0 0.0
        %1010 = vmatpush2.msra.mxu0 0.0
        %1011 = vmatprep.mubr.f32.mxu0 0.0
        %1012 = vmatmul.mubr.f32.gmra.mxu0 %v945
        %v1013 = vpop.f32.mrf.mxu0
        %v1014 = vadd.f32 0.0, %v1013
        %v1015 = vpop.f32.mrf.mxu0
        %1016 = vdwg.mxu0
        %v1018 = vsel %vm680, %v740, 0
        %1020 = vmatprep.subr.mxu0 0.0
        %1021 = vmatpush1.msra.mxu0 0.0
        %1022 = vmatprep.subr.mxu0 0.0
        %1023 = vmatpush1.msra.mxu0 0.0
        %1024 = vmatprep.subr.mxu0 0.0
        %1025 = vmatpush1.msra.mxu0 0.0
        %1026 = vmatprep.subr.mxu0 0.0
        %1027 = vmatpush1.msra.mxu0 0.0
        %1028 = vmatprep.subr.mxu0 0.0
        %1029 = vmatpush1.msra.mxu0 0.0
        %1030 = vmatprep.subr.mxu0 0.0
        %1031 = vmatpush1.msra.mxu0 0.0
        %1032 = vmatprep.subr.mxu0 0.0
        %1033 = vmatpush1.msra.mxu0 0.0
        %1034 = vmatprep.subr.mxu0 0.0
        %1035 = vmatpush1.msra.mxu0 0.0
        %1036 = vmatprep.subr.mxu0 0.0
        %1037 = vmatpush1.msra.mxu0 0.0
        %1038 = vmatprep.subr.mxu0 0.0
        %1039 = vmatpush1.msra.mxu0 0.0
        %1040 = vmatprep.subr.mxu0 0.0
        %1041 = vmatpush1.msra.mxu0 0.0
        %1042 = vmatprep.subr.mxu0 0.0
        %1043 = vmatpush1.msra.mxu0 0.0
        %1044 = vmatprep.subr.mxu0 0.0
        %1045 = vmatpush1.msra.mxu0 0.0
        %1046 = vmatprep.subr.mxu0 0.0
        %1047 = vmatpush1.msra.mxu0 0.0
        %1048 = vmatprep.subr.mxu0 0.0
        %1049 = vmatpush1.msra.mxu0 0.0
        %1050 = vmatprep.subr.mxu0 0.0
        %1051 = vmatpush1.msra.mxu0 %v370
        %1052 = vmatprep.subr.mxu0 0.0
        %1053 = vmatpush2.msra.mxu0 0.0
        %1054 = vmatprep.subr.mxu0 0.0
        %1055 = vmatpush2.msra.mxu0 0.0
        %1056 = vmatprep.subr.mxu0 0.0
        %1057 = vmatpush2.msra.mxu0 0.0
        %1058 = vmatprep.subr.mxu0 0.0
        %1059 = vmatpush2.msra.mxu0 0.0
        %1060 = vmatprep.subr.mxu0 0.0
        %1061 = vmatpush2.msra.mxu0 0.0
        %1062 = vmatprep.subr.mxu0 0.0
        %1063 = vmatpush2.msra.mxu0 0.0
        %1064 = vmatprep.subr.mxu0 0.0
        %1065 = vmatpush2.msra.mxu0 0.0
        %1066 = vmatprep.subr.mxu0 0.0
        %1067 = vmatpush2.msra.mxu0 0.0
        %1068 = vmatprep.subr.mxu0 0.0
        %1069 = vmatpush2.msra.mxu0 0.0
        %1070 = vmatprep.subr.mxu0 0.0
        %1071 = vmatpush2.msra.mxu0 0.0
        %1072 = vmatprep.subr.mxu0 0.0
        %1073 = vmatpush2.msra.mxu0 0.0
        %1074 = vmatprep.subr.mxu0 0.0
        %1075 = vmatpush2.msra.mxu0 0.0
        %1076 = vmatprep.subr.mxu0 0.0
        %1077 = vmatpush2.msra.mxu0 0.0
        %1078 = vmatprep.subr.mxu0 0.0
        %1079 = vmatpush2.msra.mxu0 0.0
        %1080 = vmatprep.subr.mxu0 0.0
        %1081 = vmatpush2.msra.mxu0 0.0
        %1082 = vmatprep.subr.mxu0 0.0
        %1083 = vmatpush2.msra.mxu0 0.0
        %1084 = vmatprep.mubr.f32.mxu0 0.0
        %1085 = vmatmul.mubr.f32.gmra.mxu0 %v1018
        %v1086 = vpop.f32.mrf.mxu0
        %v1087 = vadd.f32 0.0, %v1086
        %v1088 = vpop.f32.mrf.mxu0
        %1089 = vdwg.mxu0
        %v1090 = vadd.f32 %v794, %v868
        %v1091 = vadd.f32 %v795, %v941
        %v1092 = vadd.f32 %v796, %v1014
        %v1093 = vadd.f32 %v797, %v1087
        %1094 = vst.msk [vmem:[#allocation4] sm:$0xff] %vm371, %v1090
        %1095 = vst.msk [vmem:[#allocation4 + $0x8] sm:$0xff] %vm371, %v1091
        %1096 = vst.msk [vmem:[#allocation4 + $0x10] sm:$0xff] %vm371, %v1092
        %1097 = vst.msk [vmem:[#allocation4 + $0x18] sm:$0xff] %vm371, %v1093
        %1098 = vst.msk [vmem:[#allocation2] sm:$0xff] %vm765, %v693
        %1099 = vst.msk [vmem:[#allocation2 + $0x8] sm:$0xff] %vm765, %v694
        %1100 = vst.msk [vmem:[#allocation2 + $0x10] sm:$0xff] %vm765, %v695
        %1101 = vst.msk [vmem:[#allocation2 + $0x18] sm:$0xff] %vm765, %v696
        // Predicated region
        $region53: #{tpu_custom_call.1} parent=39 // pred_check
          %p1102 = pneg %p341
        $region54: #{tpu_custom_call.1} parent=39 // pred_check_branch
          %1104 = sbr.rel (%p1102) target = $region56
        $region55: #{tpu_custom_call.1} parent=39 // pred_region
          %v1105 = vld [vmem:[#allocation4] sm:$0xff]
          %v1106 = vld [vmem:[#allocation4 + $0x8] sm:$0xff]
          %v1107 = vld [vmem:[#allocation4 + $0x10] sm:$0xff]
          %v1108 = vld [vmem:[#allocation4 + $0x18] sm:$0xff]
          %v1109 = vld [vmem:[#allocation3] sm:$0xff]
          %v1110 = vld [vmem:[#allocation3 + $0x8] sm:$0xff]
          %v1111 = vld [vmem:[#allocation3 + $0x10] sm:$0xff]
          %v1112 = vld [vmem:[#allocation3 + $0x18] sm:$0xff]
          %v1113 = vrcp.pop %v1109
          %v1114 = vrcp.pop %v1110
          %v1115 = vrcp.pop %v1111
          %v1116 = vrcp.pop %v1112
          %1118 = vset.pattern.permute.xlu0 0
          %1119 = vperm.xlu0 %1118, %v1113
          %v1120 = vpop.permute.xlu0 %1119
          %1123 = vset.pattern.permute.xlu0 0
          %1124 = vperm.xlu0 %1123, %v1114
          %v1125 = vpop.permute.xlu0 %1124
          %1128 = vset.pattern.permute.xlu0 0
          %1129 = vperm.xlu0 %1128, %v1115
          %v1130 = vpop.permute.xlu0 %1129
          %1133 = vset.pattern.permute.xlu0 0
          %1134 = vperm.xlu0 %1133, %v1116
          %v1135 = vpop.permute.xlu0 %1134
          %v1137 = vmul.f32 %v1105, %v1120
          %v1138 = vmul.f32 %v1106, %v1125
          %v1139 = vmul.f32 %v1107, %v1130
          %v1140 = vmul.f32 %v1108, %v1135
          %v1141 = vcombine.low %v1137, %v1139
          %v1142 = vcombine.high %v1137, %v1139
          %v1144 = vunpack.c.l.s4 1983009808
          %v1145 = vunpack.c.0.s8 %v1144
          %v1146 = vlaneseq
          %v1147 = vshrl.u32 %v1146, 7
          %v1148 = vsub.s32 %v1145, %v1147
          %v1149 = vrot.slane %v1141, %v1148
          %v1151 = vunpack.c.l.s4 1983009808
          %v1152 = vunpack.c.0.s8 %v1151
          %v1153 = vlaneseq
          %v1154 = vshrl.u32 %v1153, 7
          %v1155 = vsub.s32 %v1152, %v1154
          %v1156 = vrot.slane %v1142, %v1155
          %v1157 = vcombine.low %v1138, %v1140
          %v1158 = vcombine.high %v1138, %v1140
          %v1160 = vunpack.c.l.s4 1983009808
          %v1161 = vunpack.c.0.s8 %v1160
          %v1162 = vlaneseq
          %v1163 = vshrl.u32 %v1162, 7
          %v1164 = vsub.s32 %v1161, %v1163
          %v1165 = vrot.slane %v1157, %v1164
          %v1167 = vunpack.c.l.s4 1983009808
          %v1168 = vunpack.c.0.s8 %v1167
          %v1169 = vlaneseq
          %v1170 = vshrl.u32 %v1169, 7
          %v1171 = vsub.s32 %v1168, %v1170
          %v1172 = vrot.slane %v1158, %v1171
          %v1173 = vcombine.low %v1149, %v1165
          %v1174 = vcombine.high %v1149, %v1165
          %v1176 = vunpack.c.l.s4 1934713408
          %v1177 = vunpack.c.0.s8 %v1176
          %v1178 = vlaneseq
          %v1179 = vshrl.u32 %v1178, 7
          %v1180 = vsub.s32 %v1177, %v1179
          %v1181 = vrot.slane %v1173, %v1180
          %v1183 = vunpack.c.l.s4 1934713408
          %v1184 = vunpack.c.0.s8 %v1183
          %v1185 = vlaneseq
          %v1186 = vshrl.u32 %v1185, 7
          %v1187 = vsub.s32 %v1184, %v1186
          %v1188 = vrot.slane %v1174, %v1187
          %v1189 = vcombine.low %v1156, %v1172
          %v1190 = vcombine.high %v1156, %v1172
          %v1192 = vunpack.c.l.s4 1934713408
          %v1193 = vunpack.c.0.s8 %v1192
          %v1194 = vlaneseq
          %v1195 = vshrl.u32 %v1194, 7
          %v1196 = vsub.s32 %v1193, %v1195
          %v1197 = vrot.slane %v1189, %v1196
          %v1199 = vunpack.c.l.s4 1934713408
          %v1200 = vunpack.c.0.s8 %v1199
          %v1201 = vlaneseq
          %v1202 = vshrl.u32 %v1201, 7
          %v1203 = vsub.s32 %v1200, %v1202
          %v1204 = vrot.slane %v1190, %v1203
          %v1205 = vcombine.high %v1181, 0.0
          %v1206 = vcombine.high %v1188, 0.0
          %v1207 = vcombine.high %v1197, 0.0
          %v1208 = vcombine.high %v1204, 0.0
          %v1209 = vcombine.low %v1181, %v1188
          %v1211 = vunpack.c.l.s4 1983009808
          %v1212 = vunpack.c.0.s8 %v1211
          %v1213 = vlaneseq
          %v1214 = vshrl.u32 %v1213, 7
          %v1215 = vsub.s32 %v1212, %v1214
          %v1216 = vrot.slane %v1209, %v1215
          %v1217 = vcombine.low %v1205, %v1206
          %v1219 = vunpack.c.l.s4 1983009808
          %v1220 = vunpack.c.0.s8 %v1219
          %v1221 = vlaneseq
          %v1222 = vshrl.u32 %v1221, 7
          %v1223 = vsub.s32 %v1220, %v1222
          %v1224 = vrot.slane %v1217, %v1223
          %v1225 = vcombine.low %v1197, %v1204
          %v1227 = vunpack.c.l.s4 1983009808
          %v1228 = vunpack.c.0.s8 %v1227
          %v1229 = vlaneseq
          %v1230 = vshrl.u32 %v1229, 7
          %v1231 = vsub.s32 %v1228, %v1230
          %v1232 = vrot.slane %v1225, %v1231
          %v1233 = vcombine.low %v1207, %v1208
          %v1235 = vunpack.c.l.s4 1983009808
          %v1236 = vunpack.c.0.s8 %v1235
          %v1237 = vlaneseq
          %v1238 = vshrl.u32 %v1237, 7
          %v1239 = vsub.s32 %v1236, %v1238
          %v1240 = vrot.slane %v1233, %v1239
          %v1241 = vcombine.low %v1216, %v1224
          %v1242 = vcombine.high %v1216, %v1224
          %v1244 = vunpack.c.l.s4 1934713408
          %v1245 = vunpack.c.0.s8 %v1244
          %v1246 = vlaneseq
          %v1247 = vshrl.u32 %v1246, 7
          %v1248 = vsub.s32 %v1245, %v1247
          %v1249 = vrot.slane %v1241, %v1248
          %v1251 = vunpack.c.l.s4 1934713408
          %v1252 = vunpack.c.0.s8 %v1251
          %v1253 = vlaneseq
          %v1254 = vshrl.u32 %v1253, 7
          %v1255 = vsub.s32 %v1252, %v1254
          %v1256 = vrot.slane %v1242, %v1255
          %v1257 = vcombine.low %v1232, %v1240
          %v1258 = vcombine.high %v1232, %v1240
          %v1260 = vunpack.c.l.s4 1934713408
          %v1261 = vunpack.c.0.s8 %v1260
          %v1262 = vlaneseq
          %v1263 = vshrl.u32 %v1262, 7
          %v1264 = vsub.s32 %v1261, %v1263
          %v1265 = vrot.slane %v1257, %v1264
          %v1267 = vunpack.c.l.s4 1934713408
          %v1268 = vunpack.c.0.s8 %v1267
          %v1269 = vlaneseq
          %v1270 = vshrl.u32 %v1269, 7
          %v1271 = vsub.s32 %v1268, %v1270
          %v1272 = vrot.slane %v1258, %v1271
          %v1273 = vcombine.low %v1249, %v1265
          %v1274 = vcombine.high %v1249, %v1265
          %v1275 = vcombine.low %v1256, %v1272
          %v1276 = vcombine.high %v1256, %v1272
          %1278 = vrot.lane.b32.xlu0 %v1274, 16
          %v1279 = vpop.permute.xlu0 %1278
          %1282 = vrot.lane.b32.xlu0 %v1275, 32
          %v1283 = vpop.permute.xlu0 %1282
          %1286 = vrot.lane.b32.xlu0 %v1276, 48
          %v1287 = vpop.permute.xlu0 %1286
          %v1289 = vsel %vm371, %v1273, %v1279
          %vm1290 = vcmask 261120
          %v1291 = vsel %vm1290, %v1289, %v1283
          %vm1292 = vcmask 392192
          %v1293 = vsel %vm1292, %v1291, %v1287
          %v1294 = vld [vmem:[%s3] sm:$0xff]
          %v1295 = vld [vmem:[%s3 + $0x8] sm:$0xff]
          %v1296 = vld [vmem:[%s3 + $0x10] sm:$0xff]
          %v1297 = vld [vmem:[%s3 + $0x18] sm:$0xff]
          %v1298 = vld [vmem:[%s3 + $0x20] sm:$0xff]
          %v1299 = vld [vmem:[%s3 + $0x28] sm:$0xff]
          %v1300 = vld [vmem:[%s3 + $0x30] sm:$0xff]
          %v1301 = vld [vmem:[%s3 + $0x38] sm:$0xff]
          %v1302 = vld [vmem:[%s4] sm:$0x1]
          %v1304 = vlaneseq
          %v1305 = vshrl.u32 %v1304, 7
          %v1306 = vsub.s32 0, %v1305
          %v1307 = vrot.slane %v1302, %v1306
          %vm1309 = vcmask 523264
          %v1311 = vsel %vm1309, %v1293, 0
          %1313 = vmatprep.subr.mxu0 0.0
          %1314 = vmatpush1.msra.mxu0 0.0
          %1315 = vmatprep.subr.mxu0 0.0
          %1316 = vmatpush1.msra.mxu0 0.0
          %1317 = vmatprep.subr.mxu0 0.0
          %1318 = vmatpush1.msra.mxu0 0.0
          %1319 = vmatprep.subr.mxu0 0.0
          %1320 = vmatpush1.msra.mxu0 0.0
          %1321 = vmatprep.subr.mxu0 0.0
          %1322 = vmatpush1.msra.mxu0 0.0
          %1323 = vmatprep.subr.mxu0 0.0
          %1324 = vmatpush1.msra.mxu0 0.0
          %1325 = vmatprep.subr.mxu0 0.0
          %1326 = vmatpush1.msra.mxu0 0.0
          %1327 = vmatprep.subr.mxu0 0.0
          %1328 = vmatpush1.msra.mxu0 0.0
          %1329 = vmatprep.subr.mxu0 0.0
          %1330 = vmatpush1.msra.mxu0 %v1301
          %1331 = vmatprep.subr.mxu0 0.0
          %1332 = vmatpush1.msra.mxu0 %v1300
          %1333 = vmatprep.subr.mxu0 0.0
          %1334 = vmatpush1.msra.mxu0 %v1299
          %1335 = vmatprep.subr.mxu0 0.0
          %1336 = vmatpush1.msra.mxu0 %v1298
          %1337 = vmatprep.subr.mxu0 0.0
          %1338 = vmatpush1.msra.mxu0 %v1297
          %1339 = vmatprep.subr.mxu0 0.0
          %1340 = vmatpush1.msra.mxu0 %v1296
          %1341 = vmatprep.subr.mxu0 0.0
          %1342 = vmatpush1.msra.mxu0 %v1295
          %1343 = vmatprep.subr.mxu0 0.0
          %1344 = vmatpush1.msra.mxu0 %v1294
          %1345 = vmatprep.subr.mxu0 0.0
          %1346 = vmatpush2.msra.mxu0 0.0
          %1347 = vmatprep.subr.mxu0 0.0
          %1348 = vmatpush2.msra.mxu0 0.0
          %1349 = vmatprep.subr.mxu0 0.0
          %1350 = vmatpush2.msra.mxu0 0.0
          %1351 = vmatprep.subr.mxu0 0.0
          %1352 = vmatpush2.msra.mxu0 0.0
          %1353 = vmatprep.subr.mxu0 0.0
          %1354 = vmatpush2.msra.mxu0 0.0
          %1355 = vmatprep.subr.mxu0 0.0
          %1356 = vmatpush2.msra.mxu0 0.0
          %1357 = vmatprep.subr.mxu0 0.0
          %1358 = vmatpush2.msra.mxu0 0.0
          %1359 = vmatprep.subr.mxu0 0.0
          %1360 = vmatpush2.msra.mxu0 0.0
          %1361 = vmatprep.subr.mxu0 0.0
          %1362 = vmatpush2.msra.mxu0 0.0
          %1363 = vmatprep.subr.mxu0 0.0
          %1364 = vmatpush2.msra.mxu0 0.0
          %1365 = vmatprep.subr.mxu0 0.0
          %1366 = vmatpush2.msra.mxu0 0.0
          %1367 = vmatprep.subr.mxu0 0.0
          %1368 = vmatpush2.msra.mxu0 0.0
          %1369 = vmatprep.subr.mxu0 0.0
          %1370 = vmatpush2.msra.mxu0 0.0
          %1371 = vmatprep.subr.mxu0 0.0
          %1372 = vmatpush2.msra.mxu0 0.0
          %1373 = vmatprep.subr.mxu0 0.0
          %1374 = vmatpush2.msra.mxu0 0.0
          %1375 = vmatprep.subr.mxu0 0.0
          %1376 = vmatpush2.msra.mxu0 0.0
          %1377 = vmatprep.mubr.f32.mxu0 0.0
          %1378 = vmatmul.mubr.f32.gmra.mxu0 %v1311
          %v1379 = vpop.f32.mrf.mxu0
          %v1380 = vadd.f32 %v1307, %v1379
          %v1381 = vpop.f32.mrf.mxu0
          %1382 = vdwg.mxu0
          %1383 = vst.msk [vmem:[%s332] sm:$0xff] %vm1290, %v1380
        $region56: #{tpu_custom_call.1} parent=39 // pred_fallthru
          _
        %s1384 = sand.u32 %s180, 1
        %s1385 = scalar_lea.sflag [#allocation7], %s1384
        %s1386 = sand.u32 %s180, 1
        %s1387 = smul.addr %s1386, 8
        %s1388 = scalar_lea.vmem [#allocation10], %s1387
        // Predicated region
        $region57: #{tpu_custom_call.1} parent=39 // pred_check
          %p1389 = pneg %p190
        $region58: #{tpu_custom_call.1} parent=39 // pred_check_branch
          %1391 = sbr.rel (%p1389) target = $region60
        $region59: #{tpu_custom_call.1} parent=39 // pred_region
          %s1393 = ssub.s32 128, 128
          %1394 = vsyncadd %s1385, %s1393
          %s1395 = sadd.s32 %s31, %s30
          %s1396 = smul.addr %s1395, 128
          %s1397 = scalar_lea.hbm %s5, %s1396
          %s1399 = sshll.u32 %s1388, 4
          %s1400 = int_to_ptr.vmem [resolvable:$true] %s1399
          %1402 = dma.vmem_to_hbm [thread:$0]  %s1400, 128, %s1397, %s1385
        $region60: #{tpu_custom_call.1} parent=39 // pred_fallthru
          _
      $region40: #{tpu_custom_call.1} parent=5 // pred_fallthru
        _
      %p1403 = scmp.le.s32.totalorder 2, %s20
      // Predicated region
      $region61: #{tpu_custom_call.1} parent=5 // pred_check
        %p1404 = pneg %p1403
      $region62: #{tpu_custom_call.1} parent=5 // pred_check_branch
        %1406 = sbr.rel (%p1404) target = $region64
      $region63: #{tpu_custom_call.1} parent=5 // pred_region
        %s1407 = ssub.s32 %s20, 2
        // Predicated region
        $region65: #{tpu_custom_call.1} parent=63 // pred_check
          %p1408 = pneg %p196
        $region66: #{tpu_custom_call.1} parent=63 // pred_check_branch
          %1410 = sbr.rel (%p1408) target = $region68
        $region67: #{tpu_custom_call.1} parent=63 // pred_region
          %s1411 = sand.u32 %s181, 1
          %s1412 = scalar_lea.sflag [#allocation7], %s1411
          %s1413 = sand.u32 %s181, 1
          %s1414 = smul.addr %s1413, 8
          %s1415 = scalar_lea.vmem [#allocation10], %s1414
          %1416 = dma.done %s1412, 128
        $region68: #{tpu_custom_call.1} parent=63 // pred_fallthru
          _
      $region64: #{tpu_custom_call.1} parent=5 // pred_fallthru
        _
    $region6: #{tpu_custom_call.1} parent=1 // loop_footer
      %s24 = sadd.s32 1, %s20
    $region7: #{tpu_custom_call.1} parent=1 // loop_footer_branch
      %19 = sbr.rel target = $region3
    $region8: #{tpu_custom_call.1} parent=1 // loop_exit
      _
    %1417 = vsyncpa [#allocation6], 1
    %s1418 = scalar_lea.sflag [#allocation6], 1
    %1419 = vsyncpa %s1418, 1
    %1420 = vsyncpa [#allocation9], 1
    %s1421 = scalar_lea.sflag [#allocation9], 1
    %1422 = vsyncpa %s1421, 1
    %1423 = vsyncpa [#allocation7], 1
    %s1424 = scalar_lea.sflag [#allocation7], 1
    %1425 = vsyncpa %s1424, 1

</llo_original>
